<compile_context>
chip_gen: v7x
topology: tpu7x:2x2x1
jax: 0.10.0
libtpu: 0.0.40
codegen_flags: <defaults>
</compile_context>

<pallas_src>
import jax
import jax.numpy as jnp
from jax.experimental import pallas as pl
from jax.experimental.pallas import tpu as pltpu


def _layernorm_feat(x, gamma, beta, eps=1e-5):
    """LayerNorm over the feature axis (axis 0) of a (features, batch) tile."""
    mean = jnp.mean(x, axis=0, keepdims=True)
    xc = x - mean
    var = jnp.mean(xc * xc, axis=0, keepdims=True)
    inv = jax.lax.rsqrt(var + eps)           # EUP rsqrt
    return xc * inv * gamma + beta           # gamma/beta: (features, 1), lane-broadcast


def _mish(x):
    """Mish(x) = x * tanh(softplus(x)) using a single EUP transcendental.

    tanh(log1p(e)) == (e^2 + 2e) / (e^2 + 2e + 2) with e = exp(x), so one exp
    plus an approx reciprocal (+ one Newton step on the VPU) replaces the
    exp + log1p + tanh chain of the naive form.
    """
    xs = jnp.minimum(x, 40.0)                # guard exp overflow; t ~= 1 there anyway
    e = jnp.exp(xs)
    n = e * (e + 2.0)
    d = n + 2.0
    r = pl.reciprocal(d, approx=True)        # EUP vrcp
    r = r * (2.0 - d * r)                    # one Newton step -> full f32 accuracy (VPU)
    return x * (n * r)


def v_mlp_kernel(obs_ref,
                 w1_ref, b1_ref, g1_ref, be1_ref,
                 w2_ref, b2_ref, g2_ref, be2_ref,
                 w3_ref, b3_ref, g3_ref, be3_ref,
                 w4_ref, b4_ref,
                 out_ref):
    # obs_ref: (obs_dim, block_b) -- batch on lanes.
    x = obs_ref[...].astype(jnp.float32)

    # Linear -> LayerNorm -> Tanh
    h = jnp.dot(w1_ref[...], x, preferred_element_type=jnp.float32) + b1_ref[...]
    h = jnp.tanh(_layernorm_feat(h, g1_ref[...], be1_ref[...]))

    # Linear -> LayerNorm -> Mish
    h = jnp.dot(w2_ref[...], h, preferred_element_type=jnp.float32) + b2_ref[...]
    h = _mish(_layernorm_feat(h, g2_ref[...], be2_ref[...]))

    # Linear -> LayerNorm -> Mish
    h = jnp.dot(w3_ref[...], h, preferred_element_type=jnp.float32) + b3_ref[...]
    h = _mish(_layernorm_feat(h, g3_ref[...], be3_ref[...]))

    # Final Linear(hidden, 1): broadcast-multiply + feature reduce instead of an
    # N=1 MXU push; stays lane-dense and frees the MXU slot.
    v = jnp.sum(h * w4_ref[...], axis=0, keepdims=True) + b4_ref[...]   # (1, block_b)
    out_ref[...] = v.astype(out_ref.dtype)


def _pick_block_b(B):
    # Lane-dense batch tiles with >= 2 grid steps whenever the batch allows it,
    # so the BlockSpec pipeline overlaps DMA/compute and the "parallel" batch
    # axis can shard across v7x's two TensorCores.  Per-step overhead ~0.35us,
    # so 128-512 row tiles amortize it while keeping VMEM usage tiny.
    for cand in (512, 256, 128):
        if B >= 2 * cand and B % cand == 0:
            return cand
    return B


def v_forward(obs, params, *, block_b=None):
    """V-network forward pass: obs (B, obs_dim) float32 -> (B, 1) float32."""
    B, obs_dim = obs.shape
    hidden = params["w1"].shape[0]            # w1: (hidden, obs_dim)

    if block_b is None:
        block_b = _pick_block_b(B)
    block_b = min(block_b, B)
    # TODO(synk): ragged batches unsupported; callers must pad B to a multiple of block_b.
    assert B % block_b == 0

    # Layout plumbing outside the kernel: put batch on the lane axis.
    obs_t = obs.T                              # (obs_dim, B)

    grid = (B // block_b,)

    # Parameters use a constant index_map, so their block index never changes
    # across the grid and Pallas does not re-fetch them per batch tile.
    def const_spec(shape):
        return pl.BlockSpec(shape, lambda i: (0, 0))

    in_specs = [
        pl.BlockSpec((obs_dim, block_b), lambda i: (0, i)),          # obs (transposed)
        const_spec((hidden, obs_dim)), const_spec((hidden, 1)),
        const_spec((hidden, 1)), const_spec((hidden, 1)),            # layer 1
        const_spec((hidden, hidden)), const_spec((hidden, 1)),
        const_spec((hidden, 1)), const_spec((hidden, 1)),            # layer 2
        const_spec((hidden, hidden)), const_spec((hidden, 1)),
        const_spec((hidden, 1)), const_spec((hidden, 1)),            # layer 3
        const_spec((hidden, 1)), const_spec((1, 1)),                 # final layer
    ]
    # Lane-dense output: (1, block_b) row per tile -> unmasked vector stores.
    out_spec = pl.BlockSpec((1, block_b), lambda i: (0, i))

    # Explicit VMEM budget from the actual footprint (double-buffered I/O tiles,
    # single param copy, activation temporaries, headroom), capped below v7x's
    # 64 MiB physical VMEM.
    def _nbytes(a):
        return int(a.size) * a.dtype.itemsize
    param_bytes = sum(_nbytes(p) for p in params.values())
    io_tile_bytes = (obs_dim + 1) * block_b * 4
    act_bytes = 8 * hidden * block_b * 4
    vmem_limit = min(2 * (param_bytes + io_tile_bytes) + act_bytes + (8 << 20),
                     64 << 20)

    flops = 2 * B * (obs_dim * hidden + 2 * hidden * hidden + hidden) + 24 * B * hidden
    transcendentals = B * (5 * hidden + 3)     # tanh + 2x(exp+rcp) per feature, 3 rsqrt/row
    bytes_accessed = _nbytes(obs) + B * 4 + param_bytes

    out = pl.pallas_call(
        v_mlp_kernel,
        out_shape=jax.ShapeDtypeStruct((1, B), jnp.float32),
        grid_spec=pltpu.PrefetchScalarGridSpec(
            num_scalar_prefetch=0,
            grid=grid,
            in_specs=in_specs,
            out_specs=out_spec,
        ),
        compiler_params=pltpu.CompilerParams(
            dimension_semantics=("parallel",),
            vmem_limit_bytes=int(vmem_limit),
        ),
        cost_estimate=pl.CostEstimate(
            flops=int(flops),
            transcendentals=int(transcendentals),
            bytes_accessed=int(bytes_accessed),
        ),
    )(
        obs_t,
        params["w1"], params["b1"], params["g1"], params["be1"],
        params["w2"], params["b2"], params["g2"], params["be2"],
        params["w3"], params["b3"], params["g3"], params["be3"],
        params["w4"], params["b4"],
    )
    return out.reshape(B, 1)


def init_params(key, obs_dim, hidden_dim):
    """Deterministic synthetic init (roughly matching torch default scales).

    Layout: w1/w2/w3 are (out_features, in_features); biases and LayerNorm
    gamma/beta are (features, 1) columns; the final weight w4 is stored as a
    (hidden, 1) column and b4 is (1, 1).
    """
    ks = jax.random.split(key, 8)

    def lin(kw, kb, fan_in, fan_out):
        bound = 1.0 / jnp.sqrt(jnp.float32(fan_in))
        w = jax.random.uniform(kw, (fan_out, fan_in), jnp.float32, -bound, bound)
        b = jax.random.uniform(kb, (fan_out, 1), jnp.float32, -bound, bound)
        return w, b

    w1, b1 = lin(ks[0], ks[1], obs_dim, hidden_dim)
    w2, b2 = lin(ks[2], ks[3], hidden_dim, hidden_dim)
    w3, b3 = lin(ks[4], ks[5], hidden_dim, hidden_dim)
    w4t, b4 = lin(ks[6], ks[7], hidden_dim, 1)     # torch weight shape (1, hidden)
    w4 = w4t.T                                      # store as (hidden, 1) column

    ones = jnp.ones((hidden_dim, 1), jnp.float32)
    zeros = jnp.zeros((hidden_dim, 1), jnp.float32)

    return {
        "w1": w1, "b1": b1, "g1": ones, "be1": zeros,
        "w2": w2, "b2": b2, "g2": ones, "be2": zeros,
        "w3": w3, "b3": b3, "g3": ones, "be3": zeros,
        "w4": w4, "b4": b4,
    }


def v_reference(obs, p):
    """Pure-JAX reference of the PyTorch module for sanity checking."""
    def ln(x, g, b, eps=1e-5):
        m = jnp.mean(x, -1, keepdims=True)
        v = jnp.mean((x - m) ** 2, -1, keepdims=True)
        return (x - m) / jnp.sqrt(v + eps) * g + b

    def mish(x):
        return x * jnp.tanh(jax.nn.softplus(x))

    def dense(x, w, b):       # w: (out, in), b: (out, 1)
        return x @ w.T + b[:, 0]

    h = jnp.tanh(ln(dense(obs, p["w1"], p["b1"]), p["g1"][:, 0], p["be1"][:, 0]))
    h = mish(ln(dense(h, p["w2"], p["b2"]), p["g2"][:, 0], p["be2"][:, 0]))
    h = mish(ln(dense(h, p["w3"], p["b3"]), p["g3"][:, 0], p["be3"][:, 0]))
    return h @ p["w4"] + p["b4"][:, 0]             # w4: (hidden, 1) -> (B, 1)


if __name__ == "__main__":
    key = jax.random.PRNGKey(0)
    k_obs, k_params = jax.random.split(key)

    # Small but lane-dense shapes: batch 256 -> two 128-row tiles (grid of 2),
    # obs_dim 16, hidden 32 (module default is 256; 32 keeps the demo small).
    B, obs_dim, hidden_dim = 256, 16, 32
    obs = jax.random.normal(k_obs, (B, obs_dim), jnp.float32)
    params = init_params(k_params, obs_dim, hidden_dim)

    v = v_forward(obs, params)                 # default block_b -> 128, grid=(2,)
    v = jax.block_until_ready(v)

    v_ref = v_reference(obs, params)
    assert v.shape == (B, 1)
    max_err = jnp.max(jnp.abs(v - v_ref))
    assert jnp.allclose(v, v_ref, atol=1e-4, rtol=1e-4), f"max abs err = {max_err}"
    print("KERNEL_OK")
</pallas_src>

<mosaic_0001>
module attributes {stable_mosaic.version = 11 : i64} {
  func.func @v_mlp_kernel(%arg0: i32, %arg1: memref<16x128xf32, #tpu.memory_space<vmem>>, %arg2: memref<32x16xf32, #tpu.memory_space<vmem>>, %arg3: memref<32x1xf32, #tpu.memory_space<vmem>>, %arg4: memref<32x1xf32, #tpu.memory_space<vmem>>, %arg5: memref<32x1xf32, #tpu.memory_space<vmem>>, %arg6: memref<32x32xf32, #tpu.memory_space<vmem>>, %arg7: memref<32x1xf32, #tpu.memory_space<vmem>>, %arg8: memref<32x1xf32, #tpu.memory_space<vmem>>, %arg9: memref<32x1xf32, #tpu.memory_space<vmem>>, %arg10: memref<32x32xf32, #tpu.memory_space<vmem>>, %arg11: memref<32x1xf32, #tpu.memory_space<vmem>>, %arg12: memref<32x1xf32, #tpu.memory_space<vmem>>, %arg13: memref<32x1xf32, #tpu.memory_space<vmem>>, %arg14: memref<32x1xf32, #tpu.memory_space<vmem>>, %arg15: memref<1x1xf32, #tpu.memory_space<vmem>>, %arg16: memref<1x128xf32, #tpu.memory_space<vmem>>) attributes {dimension_semantics = [#tpu.dimension_semantics<parallel>], iteration_bounds = array<i64: 2>, scalar_prefetch = 0 : i64, scratch_operands = 0 : i64, tpu.core_type = #tpu.core_type<tc>, window_params = [{transform_indices = @transform_0, window_bounds = array<i64: 16, 128>}, {pipeline_mode = #tpu.pipeline_mode<synchronous>, transform_indices = @transform_1, window_bounds = array<i64: 32, 16>}, {pipeline_mode = #tpu.pipeline_mode<synchronous>, transform_indices = @transform_2, window_bounds = array<i64: 32, 1>}, {pipeline_mode = #tpu.pipeline_mode<synchronous>, transform_indices = @transform_3, window_bounds = array<i64: 32, 1>}, {pipeline_mode = #tpu.pipeline_mode<synchronous>, transform_indices = @transform_4, window_bounds = array<i64: 32, 1>}, {pipeline_mode = #tpu.pipeline_mode<synchronous>, transform_indices = @transform_5, window_bounds = array<i64: 32, 32>}, {pipeline_mode = #tpu.pipeline_mode<synchronous>, transform_indices = @transform_6, window_bounds = array<i64: 32, 1>}, {pipeline_mode = #tpu.pipeline_mode<synchronous>, transform_indices = @transform_7, window_bounds = array<i64: 32, 1>}, {pipeline_mode = #tpu.pipeline_mode<synchronous>, transform_indices = @transform_8, window_bounds = array<i64: 32, 1>}, {pipeline_mode = #tpu.pipeline_mode<synchronous>, transform_indices = @transform_9, window_bounds = array<i64: 32, 32>}, {pipeline_mode = #tpu.pipeline_mode<synchronous>, transform_indices = @transform_10, window_bounds = array<i64: 32, 1>}, {pipeline_mode = #tpu.pipeline_mode<synchronous>, transform_indices = @transform_11, window_bounds = array<i64: 32, 1>}, {pipeline_mode = #tpu.pipeline_mode<synchronous>, transform_indices = @transform_12, window_bounds = array<i64: 32, 1>}, {pipeline_mode = #tpu.pipeline_mode<synchronous>, transform_indices = @transform_13, window_bounds = array<i64: 32, 1>}, {pipeline_mode = #tpu.pipeline_mode<synchronous>, transform_indices = @transform_14, window_bounds = array<i64: 1, 1>}, {transform_indices = @transform_15, window_bounds = array<i64: 1, 128>}]} {
    %c0 = arith.constant 0 : index
    %c0_0 = arith.constant 0 : index
    %0 = vector.load %arg1[%c0, %c0_0] : memref<16x128xf32, #tpu.memory_space<vmem>>, vector<16x128xf32>
    %c0_1 = arith.constant 0 : index
    %c0_2 = arith.constant 0 : index
    %1 = vector.load %arg2[%c0_1, %c0_2] : memref<32x16xf32, #tpu.memory_space<vmem>>, vector<32x16xf32>
    %cst = arith.constant dense<0.000000e+00> : vector<32x128xf32>
    %2 = tpu.matmul %1, %0, %cst {dimension_numbers = #tpu.dot_dimension_numbers<[1], [0], [0], [1], [0, 0, 1, 1], [], []>} : vector<32x16xf32>, vector<16x128xf32>, vector<32x128xf32> -> vector<32x128xf32>
    %c0_3 = arith.constant 0 : index
    %c0_4 = arith.constant 0 : index
    %3 = vector.load %arg3[%c0_3, %c0_4] : memref<32x1xf32, #tpu.memory_space<vmem>>, vector<32x1xf32>
    %4 = vector.broadcast %3 : vector<32x1xf32> to vector<32x128xf32>
    %5 = arith.addf %2, %4 : vector<32x128xf32>
    %c0_5 = arith.constant 0 : index
    %c0_6 = arith.constant 0 : index
    %6 = vector.load %arg4[%c0_5, %c0_6] : memref<32x1xf32, #tpu.memory_space<vmem>>, vector<32x1xf32>
    %c0_7 = arith.constant 0 : index
    %c0_8 = arith.constant 0 : index
    %7 = vector.load %arg5[%c0_7, %c0_8] : memref<32x1xf32, #tpu.memory_space<vmem>>, vector<32x1xf32>
    %cst_9 = arith.constant dense<0.000000e+00> : vector<128xf32>
    %8 = vector.multi_reduction <add>, %5, %cst_9 [0] : vector<32x128xf32> to vector<128xf32>
    %9 = vector.shape_cast %8 : vector<128xf32> to vector<1x128xf32>
    %cst_10 = arith.constant 3.200000e+01 : f32
    %10 = vector.broadcast %cst_10 : f32 to vector<1x128xf32>
    %11 = arith.divf %9, %10 : vector<1x128xf32>
    %12 = vector.broadcast %11 : vector<1x128xf32> to vector<32x128xf32>
    %13 = arith.subf %5, %12 : vector<32x128xf32>
    %14 = arith.mulf %13, %13 : vector<32x128xf32>
    %cst_11 = arith.constant dense<0.000000e+00> : vector<128xf32>
    %15 = vector.multi_reduction <add>, %14, %cst_11 [0] : vector<32x128xf32> to vector<128xf32>
    %16 = vector.shape_cast %15 : vector<128xf32> to vector<1x128xf32>
    %cst_12 = arith.constant 3.200000e+01 : f32
    %17 = vector.broadcast %cst_12 : f32 to vector<1x128xf32>
    %18 = arith.divf %16, %17 : vector<1x128xf32>
    %cst_13 = arith.constant 9.99999974E-6 : f32
    %19 = vector.broadcast %cst_13 : f32 to vector<1x128xf32>
    %20 = arith.addf %18, %19 : vector<1x128xf32>
    %21 = math.rsqrt %20 : vector<1x128xf32>
    %22 = vector.broadcast %21 : vector<1x128xf32> to vector<32x128xf32>
    %23 = arith.mulf %13, %22 : vector<32x128xf32>
    %24 = vector.broadcast %6 : vector<32x1xf32> to vector<32x128xf32>
    %25 = arith.mulf %23, %24 : vector<32x128xf32>
    %26 = vector.broadcast %7 : vector<32x1xf32> to vector<32x128xf32>
    %27 = arith.addf %25, %26 : vector<32x128xf32>
    %28 = math.tanh %27 : vector<32x128xf32>
    %c0_14 = arith.constant 0 : index
    %c0_15 = arith.constant 0 : index
    %29 = vector.load %arg6[%c0_14, %c0_15] : memref<32x32xf32, #tpu.memory_space<vmem>>, vector<32x32xf32>
    %cst_16 = arith.constant dense<0.000000e+00> : vector<32x128xf32>
    %30 = tpu.matmul %29, %28, %cst_16 {dimension_numbers = #tpu.dot_dimension_numbers<[1], [0], [0], [1], [0, 0, 1, 1], [], []>} : vector<32x32xf32>, vector<32x128xf32>, vector<32x128xf32> -> vector<32x128xf32>
    %c0_17 = arith.constant 0 : index
    %c0_18 = arith.constant 0 : index
    %31 = vector.load %arg7[%c0_17, %c0_18] : memref<32x1xf32, #tpu.memory_space<vmem>>, vector<32x1xf32>
    %32 = vector.broadcast %31 : vector<32x1xf32> to vector<32x128xf32>
    %33 = arith.addf %30, %32 : vector<32x128xf32>
    %c0_19 = arith.constant 0 : index
    %c0_20 = arith.constant 0 : index
    %34 = vector.load %arg8[%c0_19, %c0_20] : memref<32x1xf32, #tpu.memory_space<vmem>>, vector<32x1xf32>
    %c0_21 = arith.constant 0 : index
    %c0_22 = arith.constant 0 : index
    %35 = vector.load %arg9[%c0_21, %c0_22] : memref<32x1xf32, #tpu.memory_space<vmem>>, vector<32x1xf32>
    %cst_23 = arith.constant dense<0.000000e+00> : vector<128xf32>
    %36 = vector.multi_reduction <add>, %33, %cst_23 [0] : vector<32x128xf32> to vector<128xf32>
    %37 = vector.shape_cast %36 : vector<128xf32> to vector<1x128xf32>
    %cst_24 = arith.constant 3.200000e+01 : f32
    %38 = vector.broadcast %cst_24 : f32 to vector<1x128xf32>
    %39 = arith.divf %37, %38 : vector<1x128xf32>
    %40 = vector.broadcast %39 : vector<1x128xf32> to vector<32x128xf32>
    %41 = arith.subf %33, %40 : vector<32x128xf32>
    %42 = arith.mulf %41, %41 : vector<32x128xf32>
    %cst_25 = arith.constant dense<0.000000e+00> : vector<128xf32>
    %43 = vector.multi_reduction <add>, %42, %cst_25 [0] : vector<32x128xf32> to vector<128xf32>
    %44 = vector.shape_cast %43 : vector<128xf32> to vector<1x128xf32>
    %cst_26 = arith.constant 3.200000e+01 : f32
    %45 = vector.broadcast %cst_26 : f32 to vector<1x128xf32>
    %46 = arith.divf %44, %45 : vector<1x128xf32>
    %cst_27 = arith.constant 9.99999974E-6 : f32
    %47 = vector.broadcast %cst_27 : f32 to vector<1x128xf32>
    %48 = arith.addf %46, %47 : vector<1x128xf32>
    %49 = math.rsqrt %48 : vector<1x128xf32>
    %50 = vector.broadcast %49 : vector<1x128xf32> to vector<32x128xf32>
    %51 = arith.mulf %41, %50 : vector<32x128xf32>
    %52 = vector.broadcast %34 : vector<32x1xf32> to vector<32x128xf32>
    %53 = arith.mulf %51, %52 : vector<32x128xf32>
    %54 = vector.broadcast %35 : vector<32x1xf32> to vector<32x128xf32>
    %55 = arith.addf %53, %54 : vector<32x128xf32>
    %cst_28 = arith.constant 4.000000e+01 : f32
    %56 = vector.broadcast %cst_28 : f32 to vector<32x128xf32>
    %57 = arith.minimumf %55, %56 : vector<32x128xf32>
    %58 = math.exp %57 : vector<32x128xf32>
    %cst_29 = arith.constant 2.000000e+00 : f32
    %59 = vector.broadcast %cst_29 : f32 to vector<32x128xf32>
    %60 = arith.addf %58, %59 : vector<32x128xf32>
    %61 = arith.mulf %58, %60 : vector<32x128xf32>
    %cst_30 = arith.constant 2.000000e+00 : f32
    %62 = vector.broadcast %cst_30 : f32 to vector<32x128xf32>
    %63 = arith.addf %61, %62 : vector<32x128xf32>
    %64 = tpu.reciprocal %63 {approx = true} : vector<32x128xf32> -> vector<32x128xf32>
    %65 = arith.mulf %63, %64 : vector<32x128xf32>
    %cst_31 = arith.constant 2.000000e+00 : f32
    %66 = vector.broadcast %cst_31 : f32 to vector<32x128xf32>
    %67 = arith.subf %66, %65 : vector<32x128xf32>
    %68 = arith.mulf %64, %67 : vector<32x128xf32>
    %69 = arith.mulf %61, %68 : vector<32x128xf32>
    %70 = arith.mulf %55, %69 : vector<32x128xf32>
    %c0_32 = arith.constant 0 : index
    %c0_33 = arith.constant 0 : index
    %71 = vector.load %arg10[%c0_32, %c0_33] : memref<32x32xf32, #tpu.memory_space<vmem>>, vector<32x32xf32>
    %cst_34 = arith.constant dense<0.000000e+00> : vector<32x128xf32>
    %72 = tpu.matmul %71, %70, %cst_34 {dimension_numbers = #tpu.dot_dimension_numbers<[1], [0], [0], [1], [0, 0, 1, 1], [], []>} : vector<32x32xf32>, vector<32x128xf32>, vector<32x128xf32> -> vector<32x128xf32>
    %c0_35 = arith.constant 0 : index
    %c0_36 = arith.constant 0 : index
    %73 = vector.load %arg11[%c0_35, %c0_36] : memref<32x1xf32, #tpu.memory_space<vmem>>, vector<32x1xf32>
    %74 = vector.broadcast %73 : vector<32x1xf32> to vector<32x128xf32>
    %75 = arith.addf %72, %74 : vector<32x128xf32>
    %c0_37 = arith.constant 0 : index
    %c0_38 = arith.constant 0 : index
    %76 = vector.load %arg12[%c0_37, %c0_38] : memref<32x1xf32, #tpu.memory_space<vmem>>, vector<32x1xf32>
    %c0_39 = arith.constant 0 : index
    %c0_40 = arith.constant 0 : index
    %77 = vector.load %arg13[%c0_39, %c0_40] : memref<32x1xf32, #tpu.memory_space<vmem>>, vector<32x1xf32>
    %cst_41 = arith.constant dense<0.000000e+00> : vector<128xf32>
    %78 = vector.multi_reduction <add>, %75, %cst_41 [0] : vector<32x128xf32> to vector<128xf32>
    %79 = vector.shape_cast %78 : vector<128xf32> to vector<1x128xf32>
    %cst_42 = arith.constant 3.200000e+01 : f32
    %80 = vector.broadcast %cst_42 : f32 to vector<1x128xf32>
    %81 = arith.divf %79, %80 : vector<1x128xf32>
    %82 = vector.broadcast %81 : vector<1x128xf32> to vector<32x128xf32>
    %83 = arith.subf %75, %82 : vector<32x128xf32>
    %84 = arith.mulf %83, %83 : vector<32x128xf32>
    %cst_43 = arith.constant dense<0.000000e+00> : vector<128xf32>
    %85 = vector.multi_reduction <add>, %84, %cst_43 [0] : vector<32x128xf32> to vector<128xf32>
    %86 = vector.shape_cast %85 : vector<128xf32> to vector<1x128xf32>
    %cst_44 = arith.constant 3.200000e+01 : f32
    %87 = vector.broadcast %cst_44 : f32 to vector<1x128xf32>
    %88 = arith.divf %86, %87 : vector<1x128xf32>
    %cst_45 = arith.constant 9.99999974E-6 : f32
    %89 = vector.broadcast %cst_45 : f32 to vector<1x128xf32>
    %90 = arith.addf %88, %89 : vector<1x128xf32>
    %91 = math.rsqrt %90 : vector<1x128xf32>
    %92 = vector.broadcast %91 : vector<1x128xf32> to vector<32x128xf32>
    %93 = arith.mulf %83, %92 : vector<32x128xf32>
    %94 = vector.broadcast %76 : vector<32x1xf32> to vector<32x128xf32>
    %95 = arith.mulf %93, %94 : vector<32x128xf32>
    %96 = vector.broadcast %77 : vector<32x1xf32> to vector<32x128xf32>
    %97 = arith.addf %95, %96 : vector<32x128xf32>
    %cst_46 = arith.constant 4.000000e+01 : f32
    %98 = vector.broadcast %cst_46 : f32 to vector<32x128xf32>
    %99 = arith.minimumf %97, %98 : vector<32x128xf32>
    %100 = math.exp %99 : vector<32x128xf32>
    %cst_47 = arith.constant 2.000000e+00 : f32
    %101 = vector.broadcast %cst_47 : f32 to vector<32x128xf32>
    %102 = arith.addf %100, %101 : vector<32x128xf32>
    %103 = arith.mulf %100, %102 : vector<32x128xf32>
    %cst_48 = arith.constant 2.000000e+00 : f32
    %104 = vector.broadcast %cst_48 : f32 to vector<32x128xf32>
    %105 = arith.addf %103, %104 : vector<32x128xf32>
    %106 = tpu.reciprocal %105 {approx = true} : vector<32x128xf32> -> vector<32x128xf32>
    %107 = arith.mulf %105, %106 : vector<32x128xf32>
    %cst_49 = arith.constant 2.000000e+00 : f32
    %108 = vector.broadcast %cst_49 : f32 to vector<32x128xf32>
    %109 = arith.subf %108, %107 : vector<32x128xf32>
    %110 = arith.mulf %106, %109 : vector<32x128xf32>
    %111 = arith.mulf %103, %110 : vector<32x128xf32>
    %112 = arith.mulf %97, %111 : vector<32x128xf32>
    %c0_50 = arith.constant 0 : index
    %c0_51 = arith.constant 0 : index
    %113 = vector.load %arg14[%c0_50, %c0_51] : memref<32x1xf32, #tpu.memory_space<vmem>>, vector<32x1xf32>
    %114 = vector.broadcast %113 : vector<32x1xf32> to vector<32x128xf32>
    %115 = arith.mulf %112, %114 : vector<32x128xf32>
    %cst_52 = arith.constant dense<0.000000e+00> : vector<128xf32>
    %116 = vector.multi_reduction <add>, %115, %cst_52 [0] : vector<32x128xf32> to vector<128xf32>
    %117 = vector.shape_cast %116 : vector<128xf32> to vector<1x128xf32>
    %c0_53 = arith.constant 0 : index
    %c0_54 = arith.constant 0 : index
    %118 = vector.load %arg15[%c0_53, %c0_54] : memref<1x1xf32, #tpu.memory_space<vmem>>, vector<1x1xf32>
    %119 = vector.broadcast %118 : vector<1x1xf32> to vector<1x128xf32>
    %120 = arith.addf %117, %119 : vector<1x128xf32>
    %c0_55 = arith.constant 0 : index
    %c0_56 = arith.constant 0 : index
    %121 = vector.load %arg16[%c0_55, %c0_56] : memref<1x128xf32, #tpu.memory_space<vmem>>, vector<1x128xf32>
    tpu.vector_store %arg16[%c0_55, %c0_56], %120 {strides = array<i32>} : memref<1x128xf32, #tpu.memory_space<vmem>>, vector<1x128xf32>,
    return
  }
  func.func @transform_0(%arg0: i32) -> (i32, i32) {
    %c0_i32 = arith.constant 0 : i32
    %c0_i32_0 = arith.constant 0 : i32
    return %c0_i32, %arg0 : i32, i32
  }
  func.func @transform_1(%arg0: i32) -> (i32, i32) {
    %c0_i32 = arith.constant 0 : i32
    %c0_i32_0 = arith.constant 0 : i32
    %c0_i32_1 = arith.constant 0 : i32
    return %c0_i32, %c0_i32_0 : i32, i32
  }
  func.func @transform_2(%arg0: i32) -> (i32, i32) {
    %c0_i32 = arith.constant 0 : i32
    %c0_i32_0 = arith.constant 0 : i32
    %c0_i32_1 = arith.constant 0 : i32
    return %c0_i32, %c0_i32_0 : i32, i32
  }
  func.func @transform_3(%arg0: i32) -> (i32, i32) {
    %c0_i32 = arith.constant 0 : i32
    %c0_i32_0 = arith.constant 0 : i32
    %c0_i32_1 = arith.constant 0 : i32
    return %c0_i32, %c0_i32_0 : i32, i32
  }
  func.func @transform_4(%arg0: i32) -> (i32, i32) {
    %c0_i32 = arith.constant 0 : i32
    %c0_i32_0 = arith.constant 0 : i32
    %c0_i32_1 = arith.constant 0 : i32
    return %c0_i32, %c0_i32_0 : i32, i32
  }
  func.func @transform_5(%arg0: i32) -> (i32, i32) {
    %c0_i32 = arith.constant 0 : i32
    %c0_i32_0 = arith.constant 0 : i32
    %c0_i32_1 = arith.constant 0 : i32
    return %c0_i32, %c0_i32_0 : i32, i32
  }
  func.func @transform_6(%arg0: i32) -> (i32, i32) {
    %c0_i32 = arith.constant 0 : i32
    %c0_i32_0 = arith.constant 0 : i32
    %c0_i32_1 = arith.constant 0 : i32
    return %c0_i32, %c0_i32_0 : i32, i32
  }
  func.func @transform_7(%arg0: i32) -> (i32, i32) {
    %c0_i32 = arith.constant 0 : i32
    %c0_i32_0 = arith.constant 0 : i32
    %c0_i32_1 = arith.constant 0 : i32
    return %c0_i32, %c0_i32_0 : i32, i32
  }
  func.func @transform_8(%arg0: i32) -> (i32, i32) {
    %c0_i32 = arith.constant 0 : i32
    %c0_i32_0 = arith.constant 0 : i32
    %c0_i32_1 = arith.constant 0 : i32
    return %c0_i32, %c0_i32_0 : i32, i32
  }
  func.func @transform_9(%arg0: i32) -> (i32, i32) {
    %c0_i32 = arith.constant 0 : i32
    %c0_i32_0 = arith.constant 0 : i32
    %c0_i32_1 = arith.constant 0 : i32
    return %c0_i32, %c0_i32_0 : i32, i32
  }
  func.func @transform_10(%arg0: i32) -> (i32, i32) {
    %c0_i32 = arith.constant 0 : i32
    %c0_i32_0 = arith.constant 0 : i32
    %c0_i32_1 = arith.constant 0 : i32
    return %c0_i32, %c0_i32_0 : i32, i32
  }
  func.func @transform_11(%arg0: i32) -> (i32, i32) {
    %c0_i32 = arith.constant 0 : i32
    %c0_i32_0 = arith.constant 0 : i32
    %c0_i32_1 = arith.constant 0 : i32
    return %c0_i32, %c0_i32_0 : i32, i32
  }
  func.func @transform_12(%arg0: i32) -> (i32, i32) {
    %c0_i32 = arith.constant 0 : i32
    %c0_i32_0 = arith.constant 0 : i32
    %c0_i32_1 = arith.constant 0 : i32
    return %c0_i32, %c0_i32_0 : i32, i32
  }
  func.func @transform_13(%arg0: i32) -> (i32, i32) {
    %c0_i32 = arith.constant 0 : i32
    %c0_i32_0 = arith.constant 0 : i32
    %c0_i32_1 = arith.constant 0 : i32
    return %c0_i32, %c0_i32_0 : i32, i32
  }
  func.func @transform_14(%arg0: i32) -> (i32, i32) {
    %c0_i32 = arith.constant 0 : i32
    %c0_i32_0 = arith.constant 0 : i32
    %c0_i32_1 = arith.constant 0 : i32
    return %c0_i32, %c0_i32_0 : i32, i32
  }
  func.func @transform_15(%arg0: i32) -> (i32, i32) {
    %c0_i32 = arith.constant 0 : i32
    %c0_i32_0 = arith.constant 0 : i32
    return %c0_i32, %arg0 : i32, i32
  }
}

</mosaic_0001>

<llo_original>
// kernel: tpu_custom_call.1
$region0: #{tpu_custom_call.1}
  #allocation0 [shape = 'u32[]', space=smem, size = 0x4, offset = 0x4, fixed_abs, tag = 'smem constant byte address 0x4 - core index']
  #allocation1 [shape = 'u32[144,128]{1,0:T(1,128)}', space=vmem, size = 0x12000, scoped, tag = 'internal scratch']
  #allocation2 [shape = 'f32[1,1]{1,0:T(1,128)S(1)}', space=vmem, size = 0x200, scoped, tag = 'scoped memory for tpu_custom_call.1']
  %s0 = inlined_call_operand.vmem [shape: f32[16,256], index: 0, kind: input, shape index: {}]
  %s1 = inlined_call_operand.vmem [shape: f32[32,16], index: 1, kind: input, shape index: {}]
  %s2 = inlined_call_operand.vmem [shape: f32[32,1], index: 2, kind: input, shape index: {}]
  %s3 = inlined_call_operand.vmem [shape: f32[32,1], index: 3, kind: input, shape index: {}]
  %s4 = inlined_call_operand.vmem [shape: f32[32,1], index: 4, kind: input, shape index: {}]
  %s5 = inlined_call_operand.vmem [shape: f32[32,32], index: 5, kind: input, shape index: {}]
  %s6 = inlined_call_operand.vmem [shape: f32[32,1], index: 6, kind: input, shape index: {}]
  %s7 = inlined_call_operand.vmem [shape: f32[32,1], index: 7, kind: input, shape index: {}]
  %s8 = inlined_call_operand.vmem [shape: f32[32,1], index: 8, kind: input, shape index: {}]
  %s9 = inlined_call_operand.vmem [shape: f32[32,32], index: 9, kind: input, shape index: {}]
  %s10 = inlined_call_operand.vmem [shape: f32[32,1], index: 10, kind: input, shape index: {}]
  %s11 = inlined_call_operand.vmem [shape: f32[32,1], index: 11, kind: input, shape index: {}]
  %s12 = inlined_call_operand.vmem [shape: f32[32,1], index: 12, kind: input, shape index: {}]
  %s13 = inlined_call_operand.vmem [shape: f32[32,1], index: 13, kind: input, shape index: {}]
  %s14 = inlined_call_operand.<no memory space> [shape: f32[1,1], index: 14, kind: input, shape index: {}]
  %s15 = inlined_call_operand.hbm [shape: f32[1,256], index: 15, kind: output, shape index: {}]
  %s16 = sld [smem:[#allocation0]]
  $region131: #{tpu_custom_call.1} parent=0
    _
  %s18 = ssub.s32 1, %s16
  %s19 = scalar_select 0, %s18, %s16
  %v20 = vstv %s14
  %21 = vst [vmem:[#allocation2] sm:$0x1] %v20
  $region1: #{tpu_custom_call.1} parent=0
    #allocation3 [shape = 'u8[16384]{0}', space=vmem, size = 0x4000, scoped, tag = 'input window, operand 0']
    #allocation4 [shape = 'u8[1024]{0}', space=vmem, size = 0x400, scoped, tag = 'output window, operand 0']
    #allocation5 [shape = 's32[2]{0}', space=sflag, size = 0x8, scoped, tag = 'scoped memory for tpu_custom_call.1']
    %22 = vsyncpa [#allocation5], 0
    %s23 = scalar_lea.sflag [#allocation5], 1
    %24 = vsyncpa %s23, 0
    loop: start=0, step=1, limit=4
    $region2: #{tpu_custom_call.1} parent=1 // loop_pre_header
      _
    $region3: #{tpu_custom_call.1} parent=1 // loop_header
      %s26 = sphi 0, %s30
      %p27 = scmp.ge.s32.totalorder %s26, 4
      %s36 = sphi 0, %s38
      %s39 = sphi 0, %s36
      %s40 = sphi 0, %s39
      %s56 = sphi 0, %s40
      %s60 = sphi 0, %s60
      %s62 = sphi 0, %s60
      %s63 = sphi 0, %s62
      %s77 = sphi 0, %s63
      %s81 = sphi 0, %s81
      %s83 = sphi 0, %s81
      %s84 = sphi 0, %s83
      %s98 = sphi 0, %s84
      %s102 = sphi 0, %s102
      %s104 = sphi 0, %s102
      %s105 = sphi 0, %s104
      %s119 = sphi 0, %s105
      %s123 = sphi 0, %s123
      %s125 = sphi 0, %s123
      %s126 = sphi 0, %s125
      %s140 = sphi 0, %s126
      %s144 = sphi 0, %s144
      %s146 = sphi 0, %s144
      %s147 = sphi 0, %s146
      %s161 = sphi 0, %s147
      %s165 = sphi 0, %s165
      %s167 = sphi 0, %s165
      %s168 = sphi 0, %s167
      %s182 = sphi 0, %s168
      %s186 = sphi 0, %s186
      %s188 = sphi 0, %s186
      %s189 = sphi 0, %s188
      %s203 = sphi 0, %s189
      %s207 = sphi 0, %s207
      %s209 = sphi 0, %s207
      %s210 = sphi 0, %s209
      %s224 = sphi 0, %s210
      %s228 = sphi 0, %s228
      %s230 = sphi 0, %s228
      %s231 = sphi 0, %s230
      %s245 = sphi 0, %s231
      %s249 = sphi 0, %s249
      %s251 = sphi 0, %s249
      %s252 = sphi 0, %s251
      %s266 = sphi 0, %s252
      %s270 = sphi 0, %s270
      %s272 = sphi 0, %s270
      %s273 = sphi 0, %s272
      %s287 = sphi 0, %s273
      %s291 = sphi 0, %s291
      %s293 = sphi 0, %s291
      %s294 = sphi 0, %s293
      %s308 = sphi 0, %s294
      %s312 = sphi 0, %s312
      %s314 = sphi 0, %s312
      %s315 = sphi 0, %s314
      %s329 = sphi 0, %s315
      %s333 = sphi 0, %s333
      %s335 = sphi 0, %s333
      %s336 = sphi 0, %s335
      %s350 = sphi 0, %s336
      %s356 = sphi 0, %s358
      %s359 = sphi 0, %s356
      %s360 = sphi 0, %s359
      %s376 = sphi 0, %s360
    $region4: #{tpu_custom_call.1} parent=1 // loop_header_branch
      %29 = sbr.rel (%p27) target = $region8
    $region5: #{tpu_custom_call.1} parent=1 // loop_body
      %s31 = ssub.s32 %s26, 1
      %s32 = ssub.s32 %s26, 2
      %s33 = sadd.s32 %s26, 1
      %s34 = ssub.s32 %s26, %s33
      %p35 = scmp.eq.s32.totalorder %s34, 0
      %s37 = sadd.s32 %s36, 1
      %s38 = scalar_select %p35, %s36, %s37
      %p41 = pneg %p35
      %p42 = scmp.eq.s32.totalorder %s26, 1
      %p43 = por %p41, %p42
      %p44 = scmp.ne.s32.totalorder %s36, %s39
      %p45 = scmp.eq.s32.totalorder %s26, 0
      %p46 = por %p44, %p45
      %p47 = scmp.ne.s32.totalorder %s36, %s39
      %p48 = scmp.eq.s32.totalorder %s31, 1
      %p49 = por %p47, %p48
      %p50 = scmp.ne.s32.totalorder %s39, %s40
      %p51 = scmp.eq.s32.totalorder %s31, 0
      %p52 = por %p50, %p51
      %p53 = scmp.ne.s32.totalorder %s39, %s40
      %p54 = scmp.eq.s32.totalorder %s32, 1
      %p55 = por %p53, %p54
      %p57 = scmp.ne.s32.totalorder %s40, %s56
      %p58 = scmp.eq.s32.totalorder %s32, 0
      %p59 = por %p57, %p58
      %s61 = sadd.s32 %s60, 1
      %p64 = scmp.eq.s32.totalorder %s26, 1
      %p65 = scmp.ne.s32.totalorder %s60, %s62
      %p66 = scmp.eq.s32.totalorder %s26, 0
      %p67 = por %p65, %p66
      %p68 = scmp.ne.s32.totalorder %s60, %s62
      %p69 = scmp.eq.s32.totalorder %s31, 1
      %p70 = por %p68, %p69
      %p71 = scmp.ne.s32.totalorder %s62, %s63
      %p72 = scmp.eq.s32.totalorder %s31, 0
      %p73 = por %p71, %p72
      %p74 = scmp.ne.s32.totalorder %s62, %s63
      %p75 = scmp.eq.s32.totalorder %s32, 1
      %p76 = por %p74, %p75
      %p78 = scmp.ne.s32.totalorder %s63, %s77
      %p79 = scmp.eq.s32.totalorder %s32, 0
      %p80 = por %p78, %p79
      %s82 = sadd.s32 %s81, 1
      %p85 = scmp.eq.s32.totalorder %s26, 1
      %p86 = scmp.ne.s32.totalorder %s81, %s83
      %p87 = scmp.eq.s32.totalorder %s26, 0
      %p88 = por %p86, %p87
      %p89 = scmp.ne.s32.totalorder %s81, %s83
      %p90 = scmp.eq.s32.totalorder %s31, 1
      %p91 = por %p89, %p90
      %p92 = scmp.ne.s32.totalorder %s83, %s84
      %p93 = scmp.eq.s32.totalorder %s31, 0
      %p94 = por %p92, %p93
      %p95 = scmp.ne.s32.totalorder %s83, %s84
      %p96 = scmp.eq.s32.totalorder %s32, 1
      %p97 = por %p95, %p96
      %p99 = scmp.ne.s32.totalorder %s84, %s98
      %p100 = scmp.eq.s32.totalorder %s32, 0
      %p101 = por %p99, %p100
      %s103 = sadd.s32 %s102, 1
      %p106 = scmp.eq.s32.totalorder %s26, 1
      %p107 = scmp.ne.s32.totalorder %s102, %s104
      %p108 = scmp.eq.s32.totalorder %s26, 0
      %p109 = por %p107, %p108
      %p110 = scmp.ne.s32.totalorder %s102, %s104
      %p111 = scmp.eq.s32.totalorder %s31, 1
      %p112 = por %p110, %p111
      %p113 = scmp.ne.s32.totalorder %s104, %s105
      %p114 = scmp.eq.s32.totalorder %s31, 0
      %p115 = por %p113, %p114
      %p116 = scmp.ne.s32.totalorder %s104, %s105
      %p117 = scmp.eq.s32.totalorder %s32, 1
      %p118 = por %p116, %p117
      %p120 = scmp.ne.s32.totalorder %s105, %s119
      %p121 = scmp.eq.s32.totalorder %s32, 0
      %p122 = por %p120, %p121
      %s124 = sadd.s32 %s123, 1
      %p127 = scmp.eq.s32.totalorder %s26, 1
      %p128 = scmp.ne.s32.totalorder %s123, %s125
      %p129 = scmp.eq.s32.totalorder %s26, 0
      %p130 = por %p128, %p129
      %p131 = scmp.ne.s32.totalorder %s123, %s125
      %p132 = scmp.eq.s32.totalorder %s31, 1
      %p133 = por %p131, %p132
      %p134 = scmp.ne.s32.totalorder %s125, %s126
      %p135 = scmp.eq.s32.totalorder %s31, 0
      %p136 = por %p134, %p135
      %p137 = scmp.ne.s32.totalorder %s125, %s126
      %p138 = scmp.eq.s32.totalorder %s32, 1
      %p139 = por %p137, %p138
      %p141 = scmp.ne.s32.totalorder %s126, %s140
      %p142 = scmp.eq.s32.totalorder %s32, 0
      %p143 = por %p141, %p142
      %s145 = sadd.s32 %s144, 1
      %p148 = scmp.eq.s32.totalorder %s26, 1
      %p149 = scmp.ne.s32.totalorder %s144, %s146
      %p150 = scmp.eq.s32.totalorder %s26, 0
      %p151 = por %p149, %p150
      %p152 = scmp.ne.s32.totalorder %s144, %s146
      %p153 = scmp.eq.s32.totalorder %s31, 1
      %p154 = por %p152, %p153
      %p155 = scmp.ne.s32.totalorder %s146, %s147
      %p156 = scmp.eq.s32.totalorder %s31, 0
      %p157 = por %p155, %p156
      %p158 = scmp.ne.s32.totalorder %s146, %s147
      %p159 = scmp.eq.s32.totalorder %s32, 1
      %p160 = por %p158, %p159
      %p162 = scmp.ne.s32.totalorder %s147, %s161
      %p163 = scmp.eq.s32.totalorder %s32, 0
      %p164 = por %p162, %p163
      %s166 = sadd.s32 %s165, 1
      %p169 = scmp.eq.s32.totalorder %s26, 1
      %p170 = scmp.ne.s32.totalorder %s165, %s167
      %p171 = scmp.eq.s32.totalorder %s26, 0
      %p172 = por %p170, %p171
      %p173 = scmp.ne.s32.totalorder %s165, %s167
      %p174 = scmp.eq.s32.totalorder %s31, 1
      %p175 = por %p173, %p174
      %p176 = scmp.ne.s32.totalorder %s167, %s168
      %p177 = scmp.eq.s32.totalorder %s31, 0
      %p178 = por %p176, %p177
      %p179 = scmp.ne.s32.totalorder %s167, %s168
      %p180 = scmp.eq.s32.totalorder %s32, 1
      %p181 = por %p179, %p180
      %p183 = scmp.ne.s32.totalorder %s168, %s182
      %p184 = scmp.eq.s32.totalorder %s32, 0
      %p185 = por %p183, %p184
      %s187 = sadd.s32 %s186, 1
      %p190 = scmp.eq.s32.totalorder %s26, 1
      %p191 = scmp.ne.s32.totalorder %s186, %s188
      %p192 = scmp.eq.s32.totalorder %s26, 0
      %p193 = por %p191, %p192
      %p194 = scmp.ne.s32.totalorder %s186, %s188
      %p195 = scmp.eq.s32.totalorder %s31, 1
      %p196 = por %p194, %p195
      %p197 = scmp.ne.s32.totalorder %s188, %s189
      %p198 = scmp.eq.s32.totalorder %s31, 0
      %p199 = por %p197, %p198
      %p200 = scmp.ne.s32.totalorder %s188, %s189
      %p201 = scmp.eq.s32.totalorder %s32, 1
      %p202 = por %p200, %p201
      %p204 = scmp.ne.s32.totalorder %s189, %s203
      %p205 = scmp.eq.s32.totalorder %s32, 0
      %p206 = por %p204, %p205
      %s208 = sadd.s32 %s207, 1
      %p211 = scmp.eq.s32.totalorder %s26, 1
      %p212 = scmp.ne.s32.totalorder %s207, %s209
      %p213 = scmp.eq.s32.totalorder %s26, 0
      %p214 = por %p212, %p213
      %p215 = scmp.ne.s32.totalorder %s207, %s209
      %p216 = scmp.eq.s32.totalorder %s31, 1
      %p217 = por %p215, %p216
      %p218 = scmp.ne.s32.totalorder %s209, %s210
      %p219 = scmp.eq.s32.totalorder %s31, 0
      %p220 = por %p218, %p219
      %p221 = scmp.ne.s32.totalorder %s209, %s210
      %p222 = scmp.eq.s32.totalorder %s32, 1
      %p223 = por %p221, %p222
      %p225 = scmp.ne.s32.totalorder %s210, %s224
      %p226 = scmp.eq.s32.totalorder %s32, 0
      %p227 = por %p225, %p226
      %s229 = sadd.s32 %s228, 1
      %p232 = scmp.eq.s32.totalorder %s26, 1
      %p233 = scmp.ne.s32.totalorder %s228, %s230
      %p234 = scmp.eq.s32.totalorder %s26, 0
      %p235 = por %p233, %p234
      %p236 = scmp.ne.s32.totalorder %s228, %s230
      %p237 = scmp.eq.s32.totalorder %s31, 1
      %p238 = por %p236, %p237
      %p239 = scmp.ne.s32.totalorder %s230, %s231
      %p240 = scmp.eq.s32.totalorder %s31, 0
      %p241 = por %p239, %p240
      %p242 = scmp.ne.s32.totalorder %s230, %s231
      %p243 = scmp.eq.s32.totalorder %s32, 1
      %p244 = por %p242, %p243
      %p246 = scmp.ne.s32.totalorder %s231, %s245
      %p247 = scmp.eq.s32.totalorder %s32, 0
      %p248 = por %p246, %p247
      %s250 = sadd.s32 %s249, 1
      %p253 = scmp.eq.s32.totalorder %s26, 1
      %p254 = scmp.ne.s32.totalorder %s249, %s251
      %p255 = scmp.eq.s32.totalorder %s26, 0
      %p256 = por %p254, %p255
      %p257 = scmp.ne.s32.totalorder %s249, %s251
      %p258 = scmp.eq.s32.totalorder %s31, 1
      %p259 = por %p257, %p258
      %p260 = scmp.ne.s32.totalorder %s251, %s252
      %p261 = scmp.eq.s32.totalorder %s31, 0
      %p262 = por %p260, %p261
      %p263 = scmp.ne.s32.totalorder %s251, %s252
      %p264 = scmp.eq.s32.totalorder %s32, 1
      %p265 = por %p263, %p264
      %p267 = scmp.ne.s32.totalorder %s252, %s266
      %p268 = scmp.eq.s32.totalorder %s32, 0
      %p269 = por %p267, %p268
      %s271 = sadd.s32 %s270, 1
      %p274 = scmp.eq.s32.totalorder %s26, 1
      %p275 = scmp.ne.s32.totalorder %s270, %s272
      %p276 = scmp.eq.s32.totalorder %s26, 0
      %p277 = por %p275, %p276
      %p278 = scmp.ne.s32.totalorder %s270, %s272
      %p279 = scmp.eq.s32.totalorder %s31, 1
      %p280 = por %p278, %p279
      %p281 = scmp.ne.s32.totalorder %s272, %s273
      %p282 = scmp.eq.s32.totalorder %s31, 0
      %p283 = por %p281, %p282
      %p284 = scmp.ne.s32.totalorder %s272, %s273
      %p285 = scmp.eq.s32.totalorder %s32, 1
      %p286 = por %p284, %p285
      %p288 = scmp.ne.s32.totalorder %s273, %s287
      %p289 = scmp.eq.s32.totalorder %s32, 0
      %p290 = por %p288, %p289
      %s292 = sadd.s32 %s291, 1
      %p295 = scmp.eq.s32.totalorder %s26, 1
      %p296 = scmp.ne.s32.totalorder %s291, %s293
      %p297 = scmp.eq.s32.totalorder %s26, 0
      %p298 = por %p296, %p297
      %p299 = scmp.ne.s32.totalorder %s291, %s293
      %p300 = scmp.eq.s32.totalorder %s31, 1
      %p301 = por %p299, %p300
      %p302 = scmp.ne.s32.totalorder %s293, %s294
      %p303 = scmp.eq.s32.totalorder %s31, 0
      %p304 = por %p302, %p303
      %p305 = scmp.ne.s32.totalorder %s293, %s294
      %p306 = scmp.eq.s32.totalorder %s32, 1
      %p307 = por %p305, %p306
      %p309 = scmp.ne.s32.totalorder %s294, %s308
      %p310 = scmp.eq.s32.totalorder %s32, 0
      %p311 = por %p309, %p310
      %s313 = sadd.s32 %s312, 1
      %p316 = scmp.eq.s32.totalorder %s26, 1
      %p317 = scmp.ne.s32.totalorder %s312, %s314
      %p318 = scmp.eq.s32.totalorder %s26, 0
      %p319 = por %p317, %p318
      %p320 = scmp.ne.s32.totalorder %s312, %s314
      %p321 = scmp.eq.s32.totalorder %s31, 1
      %p322 = por %p320, %p321
      %p323 = scmp.ne.s32.totalorder %s314, %s315
      %p324 = scmp.eq.s32.totalorder %s31, 0
      %p325 = por %p323, %p324
      %p326 = scmp.ne.s32.totalorder %s314, %s315
      %p327 = scmp.eq.s32.totalorder %s32, 1
      %p328 = por %p326, %p327
      %p330 = scmp.ne.s32.totalorder %s315, %s329
      %p331 = scmp.eq.s32.totalorder %s32, 0
      %p332 = por %p330, %p331
      %s334 = sadd.s32 %s333, 1
      %p337 = scmp.eq.s32.totalorder %s26, 1
      %p338 = scmp.ne.s32.totalorder %s333, %s335
      %p339 = scmp.eq.s32.totalorder %s26, 0
      %p340 = por %p338, %p339
      %p341 = scmp.ne.s32.totalorder %s333, %s335
      %p342 = scmp.eq.s32.totalorder %s31, 1
      %p343 = por %p341, %p342
      %p344 = scmp.ne.s32.totalorder %s335, %s336
      %p345 = scmp.eq.s32.totalorder %s31, 0
      %p346 = por %p344, %p345
      %p347 = scmp.ne.s32.totalorder %s335, %s336
      %p348 = scmp.eq.s32.totalorder %s32, 1
      %p349 = por %p347, %p348
      %p351 = scmp.ne.s32.totalorder %s336, %s350
      %p352 = scmp.eq.s32.totalorder %s32, 0
      %p353 = por %p351, %p352
      %s354 = ssub.s32 %s26, %s33
      %p355 = scmp.eq.s32.totalorder %s354, 0
      %s357 = sadd.s32 %s356, 1
      %s358 = scalar_select %p355, %s356, %s357
      %p361 = pneg %p355
      %p362 = scmp.eq.s32.totalorder %s26, 1
      %p363 = por %p361, %p362
      %p364 = scmp.ne.s32.totalorder %s356, %s359
      %p365 = scmp.eq.s32.totalorder %s26, 0
      %p366 = por %p364, %p365
      %p367 = scmp.ne.s32.totalorder %s356, %s359
      %p368 = scmp.eq.s32.totalorder %s31, 1
      %p369 = por %p367, %p368
      %p370 = scmp.ne.s32.totalorder %s359, %s360
      %p371 = scmp.eq.s32.totalorder %s31, 0
      %p372 = por %p370, %p371
      %p373 = scmp.ne.s32.totalorder %s359, %s360
      %p374 = scmp.eq.s32.totalorder %s32, 1
      %p375 = por %p373, %p374
      %p377 = scmp.ne.s32.totalorder %s360, %s376
      %p378 = scmp.eq.s32.totalorder %s32, 0
      %p379 = por %p377, %p378
      %p380 = scmp.le.s32.totalorder 1, %s26
      %p381 = scmp.lt.s32.totalorder %s26, 3
      %p382 = pnand %p380, %p381
      %p383 = pneg %p382
      // Predicated region
      $region9: #{tpu_custom_call.1} parent=5 // pred_check
        _
      $region10: #{tpu_custom_call.1} parent=5 // pred_check_branch
        %385 = sbr.rel (%p382) target = $region12
      $region11: #{tpu_custom_call.1} parent=5 // pred_region
        %s386 = ssub.s32 %s26, 1
        // Predicated region
        $region13: #{tpu_custom_call.1} parent=11 // pred_check
          %p387 = pneg %p73
        $region14: #{tpu_custom_call.1} parent=11 // pred_check_branch
          %389 = sbr.rel (%p387) target = $region16
        $region15: #{tpu_custom_call.1} parent=11 // pred_region
          _
        $region16: #{tpu_custom_call.1} parent=11 // pred_fallthru
          _
        // Predicated region
        $region17: #{tpu_custom_call.1} parent=11 // pred_check
          %p390 = pneg %p94
        $region18: #{tpu_custom_call.1} parent=11 // pred_check_branch
          %392 = sbr.rel (%p390) target = $region20
        $region19: #{tpu_custom_call.1} parent=11 // pred_region
          _
        $region20: #{tpu_custom_call.1} parent=11 // pred_fallthru
          _
        // Predicated region
        $region21: #{tpu_custom_call.1} parent=11 // pred_check
          %p393 = pneg %p115
        $region22: #{tpu_custom_call.1} parent=11 // pred_check_branch
          %395 = sbr.rel (%p393) target = $region24
        $region23: #{tpu_custom_call.1} parent=11 // pred_region
          _
        $region24: #{tpu_custom_call.1} parent=11 // pred_fallthru
          _
        // Predicated region
        $region25: #{tpu_custom_call.1} parent=11 // pred_check
          %p396 = pneg %p136
        $region26: #{tpu_custom_call.1} parent=11 // pred_check_branch
          %398 = sbr.rel (%p396) target = $region28
        $region27: #{tpu_custom_call.1} parent=11 // pred_region
          _
        $region28: #{tpu_custom_call.1} parent=11 // pred_fallthru
          _
        // Predicated region
        $region29: #{tpu_custom_call.1} parent=11 // pred_check
          %p399 = pneg %p157
        $region30: #{tpu_custom_call.1} parent=11 // pred_check_branch
          %401 = sbr.rel (%p399) target = $region32
        $region31: #{tpu_custom_call.1} parent=11 // pred_region
          _
        $region32: #{tpu_custom_call.1} parent=11 // pred_fallthru
          _
        // Predicated region
        $region33: #{tpu_custom_call.1} parent=11 // pred_check
          %p402 = pneg %p178
        $region34: #{tpu_custom_call.1} parent=11 // pred_check_branch
          %404 = sbr.rel (%p402) target = $region36
        $region35: #{tpu_custom_call.1} parent=11 // pred_region
          _
        $region36: #{tpu_custom_call.1} parent=11 // pred_fallthru
          _
        // Predicated region
        $region37: #{tpu_custom_call.1} parent=11 // pred_check
          %p405 = pneg %p199
        $region38: #{tpu_custom_call.1} parent=11 // pred_check_branch
          %407 = sbr.rel (%p405) target = $region40
        $region39: #{tpu_custom_call.1} parent=11 // pred_region
          _
        $region40: #{tpu_custom_call.1} parent=11 // pred_fallthru
          _
        // Predicated region
        $region41: #{tpu_custom_call.1} parent=11 // pred_check
          %p408 = pneg %p220
        $region42: #{tpu_custom_call.1} parent=11 // pred_check_branch
          %410 = sbr.rel (%p408) target = $region44
        $region43: #{tpu_custom_call.1} parent=11 // pred_region
          _
        $region44: #{tpu_custom_call.1} parent=11 // pred_fallthru
          _
        // Predicated region
        $region45: #{tpu_custom_call.1} parent=11 // pred_check
          %p411 = pneg %p241
        $region46: #{tpu_custom_call.1} parent=11 // pred_check_branch
          %413 = sbr.rel (%p411) target = $region48
        $region47: #{tpu_custom_call.1} parent=11 // pred_region
          _
        $region48: #{tpu_custom_call.1} parent=11 // pred_fallthru
          _
        // Predicated region
        $region49: #{tpu_custom_call.1} parent=11 // pred_check
          %p414 = pneg %p262
        $region50: #{tpu_custom_call.1} parent=11 // pred_check_branch
          %416 = sbr.rel (%p414) target = $region52
        $region51: #{tpu_custom_call.1} parent=11 // pred_region
          _
        $region52: #{tpu_custom_call.1} parent=11 // pred_fallthru
          _
        // Predicated region
        $region53: #{tpu_custom_call.1} parent=11 // pred_check
          %p417 = pneg %p283
        $region54: #{tpu_custom_call.1} parent=11 // pred_check_branch
          %419 = sbr.rel (%p417) target = $region56
        $region55: #{tpu_custom_call.1} parent=11 // pred_region
          _
        $region56: #{tpu_custom_call.1} parent=11 // pred_fallthru
          _
        // Predicated region
        $region57: #{tpu_custom_call.1} parent=11 // pred_check
          %p420 = pneg %p304
        $region58: #{tpu_custom_call.1} parent=11 // pred_check_branch
          %422 = sbr.rel (%p420) target = $region60
        $region59: #{tpu_custom_call.1} parent=11 // pred_region
          _
        $region60: #{tpu_custom_call.1} parent=11 // pred_fallthru
          _
        // Predicated region
        $region61: #{tpu_custom_call.1} parent=11 // pred_check
          %p423 = pneg %p325
        $region62: #{tpu_custom_call.1} parent=11 // pred_check_branch
          %425 = sbr.rel (%p423) target = $region64
        $region63: #{tpu_custom_call.1} parent=11 // pred_region
          _
        $region64: #{tpu_custom_call.1} parent=11 // pred_fallthru
          _
        // Predicated region
        $region65: #{tpu_custom_call.1} parent=11 // pred_check
          %p426 = pneg %p346
        $region66: #{tpu_custom_call.1} parent=11 // pred_check_branch
          %428 = sbr.rel (%p426) target = $region68
        $region67: #{tpu_custom_call.1} parent=11 // pred_region
          _
        $region68: #{tpu_custom_call.1} parent=11 // pred_fallthru
          _
      $region12: #{tpu_custom_call.1} parent=5 // pred_fallthru
        _
      %p429 = scmp.lt.s32.totalorder %s26, 2
      // Predicated region
      $region69: #{tpu_custom_call.1} parent=5 // pred_check
        %p430 = pneg %p429
      $region70: #{tpu_custom_call.1} parent=5 // pred_check_branch
        %432 = sbr.rel (%p430) target = $region72
      $region71: #{tpu_custom_call.1} parent=5 // pred_region
        // Predicated region
        $region73: #{tpu_custom_call.1} parent=71 // pred_check
          %p433 = pneg %p46
        $region74: #{tpu_custom_call.1} parent=71 // pred_check_branch
          %435 = sbr.rel (%p433) target = $region76
        $region75: #{tpu_custom_call.1} parent=71 // pred_region
          %s436 = sand.u32 %s36, 1
          %s437 = sand.u32 %s36, 1
          %s438 = smul.addr %s437, 16
          %s439 = scalar_lea.vmem [#allocation3], %s438
          %s440 = smul.addr %s26, 8
          %s441 = scalar_lea.vmem %s0, %s440
          // Predicated region
          $region77: #{tpu_custom_call.1} parent=75 // pred_check
            _
          $region78: #{tpu_custom_call.1} parent=75 // pred_check_branch
            %443 = sbr.rel (0) target = $region80
          $region79: #{tpu_custom_call.1} parent=75 // pred_region
            // Predicated region
            $region81: #{tpu_custom_call.1} parent=79 // pred_check
              _
            $region82: #{tpu_custom_call.1} parent=79 // pred_check_branch
              %445 = sbr.rel (0) target = $region84
            $region83: #{tpu_custom_call.1} parent=79 // pred_region
              // Predicated region
              $region96: #{tpu_custom_call.1} parent=83 // pred_check
                _
              $region97: #{tpu_custom_call.1} parent=83 // pred_check_branch
                %462 = sbr.rel (0) target = $region99
              $region98: #{tpu_custom_call.1} parent=83 // pred_region
                loop: start=0, step=1, limit=1
                $region100: #{tpu_custom_call.1} parent=98 // loop_pre_header
                  _
                $region101: #{tpu_custom_call.1} parent=98 // loop_header
                  %s464 = sphi 0, %s468
                  %p465 = scmp.ge.s32.totalorder %s464, 1
                  %s469 = sphi %s441, %s441
                  %s470 = sphi %s439, %s439
                $region102: #{tpu_custom_call.1} parent=98 // loop_header_branch
                  %467 = sbr.rel (%p465) target = $region106
                $region103: #{tpu_custom_call.1} parent=98 // loop_body
                  %v471 = vld [vmem:[%s469] sm:$0xff]
                  %472 = vst [vmem:[%s470] sm:$0xff] %v471
                  %v473 = vld [vmem:[%s469 + $0x10] sm:$0xff]
                  %474 = vst [vmem:[%s470 + $0x8] sm:$0xff] %v473
                $region104: #{tpu_custom_call.1} parent=98 // loop_footer
                  %s468 = sadd.s32 1, %s464
                $region105: #{tpu_custom_call.1} parent=98 // loop_footer_branch
                  %463 = sbr.rel target = $region101
                $region106: #{tpu_custom_call.1} parent=98 // loop_exit
                  _
              $region99: #{tpu_custom_call.1} parent=83 // pred_fallthru
                _
              // Predicated region
              $region107: #{tpu_custom_call.1} parent=83 // pred_check
                _
              $region108: #{tpu_custom_call.1} parent=83 // pred_check_branch
                %476 = sbr.rel target = $region110
              $region109: #{tpu_custom_call.1} parent=83 // pred_region
                _
              $region110: #{tpu_custom_call.1} parent=83 // pred_fallthru
                _
            $region84: #{tpu_custom_call.1} parent=79 // pred_fallthru
              _
            // Predicated region
            $region85: #{tpu_custom_call.1} parent=79 // pred_check
              _
            $region86: #{tpu_custom_call.1} parent=79 // pred_check_branch
              %447 = sbr.rel target = $region88
            $region87: #{tpu_custom_call.1} parent=79 // pred_region
              loop: start=0, step=1, limit=1
              $region89: #{tpu_custom_call.1} parent=87 // loop_pre_header
                _
              $region90: #{tpu_custom_call.1} parent=87 // loop_header
                %s450 = sphi 0, %s454
                %p451 = scmp.ge.s32.totalorder %s450, 1
                %s455 = sphi %s441, %s441
                %s456 = sphi %s439, %s439
              $region91: #{tpu_custom_call.1} parent=87 // loop_header_branch
                %453 = sbr.rel (%p451) target = $region95
              $region92: #{tpu_custom_call.1} parent=87 // loop_body
                %v457 = vld [vmem:[%s455] sm:$0xff]
                %458 = vst [vmem:[%s456] sm:$0xff] %v457
                %v459 = vld [vmem:[%s455 + $0x10] sm:$0xff]
                %460 = vst [vmem:[%s456 + $0x8] sm:$0xff] %v459
              $region93: #{tpu_custom_call.1} parent=87 // loop_footer
                %s454 = sadd.s32 1, %s450
              $region94: #{tpu_custom_call.1} parent=87 // loop_footer_branch
                %449 = sbr.rel target = $region90
              $region95: #{tpu_custom_call.1} parent=87 // loop_exit
                _
            $region88: #{tpu_custom_call.1} parent=79 // pred_fallthru
              _
          $region80: #{tpu_custom_call.1} parent=75 // pred_fallthru
            _
          %477 = vnop
        $region76: #{tpu_custom_call.1} parent=71 // pred_fallthru
          _
      $region72: #{tpu_custom_call.1} parent=5 // pred_fallthru
        _
      %p478 = scmp.le.s32.totalorder 1, %s26
      %p479 = scmp.lt.s32.totalorder %s26, 3
      %p480 = pnand %p478, %p479
      %p481 = pneg %p480
      // Predicated region
      $region111: #{tpu_custom_call.1} parent=5 // pred_check
        _
      $region112: #{tpu_custom_call.1} parent=5 // pred_check_branch
        %483 = sbr.rel (%p480) target = $region114
      $region113: #{tpu_custom_call.1} parent=5 // pred_region
        %s484 = ssub.s32 %s26, 1
        %s485 = sand.u32 %s39, 1
        %s486 = sand.u32 %s39, 1
        %s487 = smul.addr %s486, 16
        %s488 = scalar_lea.vmem [#allocation3], %s487
        // Predicated region
        $region115: #{tpu_custom_call.1} parent=113 // pred_check
          %p489 = pneg %p52
        $region116: #{tpu_custom_call.1} parent=113 // pred_check_branch
          %491 = sbr.rel (%p489) target = $region118
        $region117: #{tpu_custom_call.1} parent=113 // pred_region
          _
        $region118: #{tpu_custom_call.1} parent=113 // pred_fallthru
          _
        %s492 = sand.u32 %s39, 1
        %s493 = sand.u32 %s39, 1
        %s494 = smul.addr %s493, 16
        %s495 = scalar_lea.vmem [#allocation3], %s494
        %p496 = pneg %p52
        %p497 = pneg %p49
        %p498 = pneg %p73
        %p499 = pneg %p70
        %p500 = pneg %p94
        %p501 = pneg %p91
        %p502 = pneg %p115
        %p503 = pneg %p112
        %p504 = pneg %p136
        %p505 = pneg %p133
        %p506 = pneg %p157
        %p507 = pneg %p154
        %p508 = pneg %p178
        %p509 = pneg %p175
        %p510 = pneg %p199
        %p511 = pneg %p196
        %p512 = pneg %p220
        %p513 = pneg %p217
        %p514 = pneg %p241
        %p515 = pneg %p238
        %p516 = pneg %p262
        %p517 = pneg %p259
        %p518 = pneg %p283
        %p519 = pneg %p280
        %p520 = pneg %p304
        %p521 = pneg %p301
        %p522 = pneg %p325
        %p523 = pneg %p322
        %p524 = pneg %p346
        %p525 = pneg %p343
        %p526 = pneg %p372
        %p527 = pneg %p369
        %s528 = sand.u32 %s359, 1
        %s529 = scalar_lea.sflag [#allocation5], %s528
        %s530 = sand.u32 %s359, 1
        %s531 = scalar_lea.vmem [#allocation4], %s530
        %v532 = vld [vmem:[%s488] sm:$0xff]
        %v533 = vld [vmem:[%s488 + $0x8] sm:$0xff]
        %v534 = vld [vmem:[%s1] sm:$0xff]
        %v535 = vld [vmem:[%s1 + $0x8] sm:$0xff]
        %v536 = vld [vmem:[%s1 + $0x10] sm:$0xff]
        %v537 = vld [vmem:[%s1 + $0x18] sm:$0xff]
        %v538 = vld [vmem:[%s2] sm:$0xff]
        %v539 = vld [vmem:[%s2 + $0x8] sm:$0xff]
        %v540 = vld [vmem:[%s2 + $0x10] sm:$0xff]
        %v541 = vld [vmem:[%s2 + $0x18] sm:$0xff]
        %543 = vset.pattern.permute.xlu0 0
        %544 = vperm.xlu0 %543, %v538
        %v545 = vpop.permute.xlu0 %544
        %548 = vset.pattern.permute.xlu0 0
        %549 = vperm.xlu0 %548, %v539
        %v550 = vpop.permute.xlu0 %549
        %553 = vset.pattern.permute.xlu0 0
        %554 = vperm.xlu0 %553, %v540
        %v555 = vpop.permute.xlu0 %554
        %558 = vset.pattern.permute.xlu0 0
        %559 = vperm.xlu0 %558, %v541
        %v560 = vpop.permute.xlu0 %559
        %vm562 = vcmask 130048
        %v564 = vsel %vm562, %v534, 0
        %v567 = vsel %vm562, %v535, 0
        %v570 = vsel %vm562, %v536, 0
        %v573 = vsel %vm562, %v537, 0
        %575 = vmatprep.subr.mxu0 0.0
        %576 = vmatpush1.msra.mxu0 %v532
        %577 = vmatprep.subr.mxu0 0.0
        %578 = vmatpush1.msra.mxu0 %v533
        %579 = vmatprep.subr.mxu0 0.0
        %580 = vmatpush1.msra.mxu0 0.0
        %581 = vmatprep.subr.mxu0 0.0
        %582 = vmatpush1.msra.mxu0 0.0
        %583 = vmatprep.subr.mxu0 0.0
        %584 = vmatpush1.msra.mxu0 0.0
        %585 = vmatprep.subr.mxu0 0.0
        %586 = vmatpush1.msra.mxu0 0.0
        %587 = vmatprep.subr.mxu0 0.0
        %588 = vmatpush1.msra.mxu0 0.0
        %589 = vmatprep.subr.mxu0 0.0
        %590 = vmatpush1.msra.mxu0 0.0
        %591 = vmatprep.subr.mxu0 0.0
        %592 = vmatpush1.msra.mxu0 0.0
        %593 = vmatprep.subr.mxu0 0.0
        %594 = vmatpush1.msra.mxu0 0.0
        %595 = vmatprep.subr.mxu0 0.0
        %596 = vmatpush1.msra.mxu0 0.0
        %597 = vmatprep.subr.mxu0 0.0
        %598 = vmatpush1.msra.mxu0 0.0
        %599 = vmatprep.subr.mxu0 0.0
        %600 = vmatpush1.msra.mxu0 0.0
        %601 = vmatprep.subr.mxu0 0.0
        %602 = vmatpush1.msra.mxu0 0.0
        %603 = vmatprep.subr.mxu0 0.0
        %604 = vmatpush1.msra.mxu0 0.0
        %605 = vmatprep.subr.mxu0 0.0
        %606 = vmatpush1.msra.mxu0 0.0
        %607 = vmatprep.subr.mxu0 0.0
        %608 = vmatpush1.msra.mxu0 0.0
        %609 = vmatprep.subr.mxu0 0.0
        %610 = vmatpush1.msra.mxu0 0.0
        %611 = vmatprep.subr.mxu0 0.0
        %612 = vmatpush1.msra.mxu0 0.0
        %613 = vmatprep.subr.mxu0 0.0
        %614 = vmatpush1.msra.mxu0 0.0
        %615 = vmatprep.subr.mxu0 0.0
        %616 = vmatpush1.msra.mxu0 0.0
        %617 = vmatprep.subr.mxu0 0.0
        %618 = vmatpush1.msra.mxu0 0.0
        %619 = vmatprep.subr.mxu0 0.0
        %620 = vmatpush1.msra.mxu0 0.0
        %621 = vmatprep.subr.mxu0 0.0
        %622 = vmatpush1.msra.mxu0 0.0
        %623 = vmatprep.subr.mxu0 0.0
        %624 = vmatpush1.msra.mxu0 0.0
        %625 = vmatprep.subr.mxu0 0.0
        %626 = vmatpush1.msra.mxu0 0.0
        %627 = vmatprep.subr.mxu0 0.0
        %628 = vmatpush1.msra.mxu0 0.0
        %629 = vmatprep.subr.mxu0 0.0
        %630 = vmatpush1.msra.mxu0 0.0
        %631 = vmatprep.subr.mxu0 0.0
        %632 = vmatpush1.msra.mxu0 0.0
        %633 = vmatprep.subr.mxu0 0.0
        %634 = vmatpush1.msra.mxu0 0.0
        %635 = vmatprep.subr.mxu0 0.0
        %636 = vmatpush1.msra.mxu0 0.0
        %637 = vmatprep.subr.mxu0 0.0
        %638 = vmatpush1.msra.mxu0 0.0
        %639 = vmatprep.mubr.f32.mxu0 0.0
        %640 = vmatmul.mubr.f32.gmra.mrb[0].mxu0 %v564
        %v641 = vpop.f32.mrb[0].mxu0
        %v642 = vadd.f32 %v545, %v641
        %v643 = vpop.f32.mrb[0].mxu0
        %644 = vmatprep.mubr.f32.mxu0 0.0
        %645 = vmatmul.mubr.f32.gmra.mrb[0].mxu0 %v567
        %v646 = vpop.f32.mrb[0].mxu0
        %v647 = vadd.f32 %v550, %v646
        %v648 = vpop.f32.mrb[0].mxu0
        %649 = vmatprep.mubr.f32.mxu0 0.0
        %650 = vmatmul.mubr.f32.gmra.mrb[0].mxu0 %v570
        %v651 = vpop.f32.mrb[0].mxu0
        %v652 = vadd.f32 %v555, %v651
        %v653 = vpop.f32.mrb[0].mxu0
        %654 = vmatprep.mubr.f32.mxu0 0.0
        %655 = vmatmul.mubr.f32.gmra.mrb[0].mxu0 %v573
        %v656 = vpop.f32.mrb[0].mxu0
        %v657 = vadd.f32 %v560, %v656
        %v658 = vpop.f32.mrb[0].mxu0
        %659 = vdwg.mxu0
        %v660 = vld [vmem:[%s3] sm:$0xff]
        %v661 = vld [vmem:[%s3 + $0x8] sm:$0xff]
        %v662 = vld [vmem:[%s3 + $0x10] sm:$0xff]
        %v663 = vld [vmem:[%s3 + $0x18] sm:$0xff]
        %v664 = vld [vmem:[%s4] sm:$0xff]
        %v665 = vld [vmem:[%s4 + $0x8] sm:$0xff]
        %v666 = vld [vmem:[%s4 + $0x10] sm:$0xff]
        %v667 = vld [vmem:[%s4 + $0x18] sm:$0xff]
        %v668 = vadd.f32 %v642, %v647
        %v669 = vadd.f32 %v668, %v652
        %v670 = vadd.f32 %v669, %v657
        %v671 = vrot.slane %v670, 4
        %v672 = vadd.f32 %v670, %v671
        %v673 = vrot.slane %v672, 2
        %v674 = vadd.f32 %v672, %v673
        %v675 = vrot.slane %v674, 1
        %v676 = vadd.f32 %v674, %v675
        %v677 = vrcp.pop 32.0
        %v678 = vmul.f32 %v676, %v677
        %v679 = vsub.f32 %v642, %v678
        %v680 = vsub.f32 %v647, %v678
        %v681 = vsub.f32 %v652, %v678
        %v682 = vsub.f32 %v657, %v678
        %v683 = vmul.f32 %v679, %v679
        %v684 = vmul.f32 %v680, %v680
        %v685 = vmul.f32 %v681, %v681
        %v686 = vmul.f32 %v682, %v682
        %v687 = vadd.f32 %v683, %v684
        %v688 = vadd.f32 %v687, %v685
        %v689 = vadd.f32 %v688, %v686
        %v690 = vrot.slane %v689, 4
        %v691 = vadd.f32 %v689, %v690
        %v692 = vrot.slane %v691, 2
        %v693 = vadd.f32 %v691, %v692
        %v694 = vrot.slane %v693, 1
        %v695 = vadd.f32 %v693, %v694
        %v696 = vmul.f32 %v695, %v677
        %v697 = vadd.f32 %v696, 1e-05
        %v698 = vrsqrt.pop %v697
        %v699 = vmul.f32 %v679, %v698
        %v700 = vmul.f32 %v680, %v698
        %v701 = vmul.f32 %v681, %v698
        %v702 = vmul.f32 %v682, %v698
        %704 = vset.pattern.permute.xlu0 0
        %705 = vperm.xlu0 %704, %v660
        %v706 = vpop.permute.xlu0 %705
        %709 = vset.pattern.permute.xlu0 0
        %710 = vperm.xlu0 %709, %v661
        %v711 = vpop.permute.xlu0 %710
        %714 = vset.pattern.permute.xlu0 0
        %715 = vperm.xlu0 %714, %v662
        %v716 = vpop.permute.xlu0 %715
        %719 = vset.pattern.permute.xlu0 0
        %720 = vperm.xlu0 %719, %v663
        %v721 = vpop.permute.xlu0 %720
        %v723 = vmul.f32 %v699, %v706
        %v724 = vmul.f32 %v700, %v711
        %v725 = vmul.f32 %v701, %v716
        %v726 = vmul.f32 %v702, %v721
        %728 = vset.pattern.permute.xlu0 0
        %729 = vperm.xlu0 %728, %v664
        %v730 = vpop.permute.xlu0 %729
        %733 = vset.pattern.permute.xlu0 0
        %734 = vperm.xlu0 %733, %v665
        %v735 = vpop.permute.xlu0 %734
        %738 = vset.pattern.permute.xlu0 0
        %739 = vperm.xlu0 %738, %v666
        %v740 = vpop.permute.xlu0 %739
        %743 = vset.pattern.permute.xlu0 0
        %744 = vperm.xlu0 %743, %v667
        %v745 = vpop.permute.xlu0 %744
        %v747 = vadd.f32 %v723, %v730
        %v748 = vadd.f32 %v724, %v735
        %v749 = vadd.f32 %v725, %v740
        %v750 = vadd.f32 %v726, %v745
        %v751 = vtanh.pop %v747
        %v752 = vtanh.pop %v748
        %v753 = vtanh.pop %v749
        %v754 = vtanh.pop %v750
        %v755 = vld [vmem:[%s5] sm:$0xff]
        %v756 = vld [vmem:[%s5 + $0x8] sm:$0xff]
        %v757 = vld [vmem:[%s5 + $0x10] sm:$0xff]
        %v758 = vld [vmem:[%s5 + $0x18] sm:$0xff]
        %v759 = vld [vmem:[%s6] sm:$0xff]
        %v760 = vld [vmem:[%s6 + $0x8] sm:$0xff]
        %v761 = vld [vmem:[%s6 + $0x10] sm:$0xff]
        %v762 = vld [vmem:[%s6 + $0x18] sm:$0xff]
        %764 = vset.pattern.permute.xlu0 0
        %765 = vperm.xlu0 %764, %v759
        %v766 = vpop.permute.xlu0 %765
        %769 = vset.pattern.permute.xlu0 0
        %770 = vperm.xlu0 %769, %v760
        %v771 = vpop.permute.xlu0 %770
        %774 = vset.pattern.permute.xlu0 0
        %775 = vperm.xlu0 %774, %v761
        %v776 = vpop.permute.xlu0 %775
        %779 = vset.pattern.permute.xlu0 0
        %780 = vperm.xlu0 %779, %v762
        %v781 = vpop.permute.xlu0 %780
        %vm783 = vcmask 261120
        %v785 = vsel %vm783, %v755, 0
        %v788 = vsel %vm783, %v756, 0
        %v791 = vsel %vm783, %v757, 0
        %v794 = vsel %vm783, %v758, 0
        %796 = vmatprep.subr.mxu0 0.0
        %797 = vmatpush1.msra.mxu0 %v751
        %798 = vmatprep.subr.mxu0 0.0
        %799 = vmatpush1.msra.mxu0 %v752
        %800 = vmatprep.subr.mxu0 0.0
        %801 = vmatpush1.msra.mxu0 %v753
        %802 = vmatprep.subr.mxu0 0.0
        %803 = vmatpush1.msra.mxu0 %v754
        %804 = vmatprep.subr.mxu0 0.0
        %805 = vmatpush1.msra.mxu0 0.0
        %806 = vmatprep.subr.mxu0 0.0
        %807 = vmatpush1.msra.mxu0 0.0
        %808 = vmatprep.subr.mxu0 0.0
        %809 = vmatpush1.msra.mxu0 0.0
        %810 = vmatprep.subr.mxu0 0.0
        %811 = vmatpush1.msra.mxu0 0.0
        %812 = vmatprep.subr.mxu0 0.0
        %813 = vmatpush1.msra.mxu0 0.0
        %814 = vmatprep.subr.mxu0 0.0
        %815 = vmatpush1.msra.mxu0 0.0
        %816 = vmatprep.subr.mxu0 0.0
        %817 = vmatpush1.msra.mxu0 0.0
        %818 = vmatprep.subr.mxu0 0.0
        %819 = vmatpush1.msra.mxu0 0.0
        %820 = vmatprep.subr.mxu0 0.0
        %821 = vmatpush1.msra.mxu0 0.0
        %822 = vmatprep.subr.mxu0 0.0
        %823 = vmatpush1.msra.mxu0 0.0
        %824 = vmatprep.subr.mxu0 0.0
        %825 = vmatpush1.msra.mxu0 0.0
        %826 = vmatprep.subr.mxu0 0.0
        %827 = vmatpush1.msra.mxu0 0.0
        %828 = vmatprep.subr.mxu0 0.0
        %829 = vmatpush1.msra.mxu0 0.0
        %830 = vmatprep.subr.mxu0 0.0
        %831 = vmatpush1.msra.mxu0 0.0
        %832 = vmatprep.subr.mxu0 0.0
        %833 = vmatpush1.msra.mxu0 0.0
        %834 = vmatprep.subr.mxu0 0.0
        %835 = vmatpush1.msra.mxu0 0.0
        %836 = vmatprep.subr.mxu0 0.0
        %837 = vmatpush1.msra.mxu0 0.0
        %838 = vmatprep.subr.mxu0 0.0
        %839 = vmatpush1.msra.mxu0 0.0
        %840 = vmatprep.subr.mxu0 0.0
        %841 = vmatpush1.msra.mxu0 0.0
        %842 = vmatprep.subr.mxu0 0.0
        %843 = vmatpush1.msra.mxu0 0.0
        %844 = vmatprep.subr.mxu0 0.0
        %845 = vmatpush1.msra.mxu0 0.0
        %846 = vmatprep.subr.mxu0 0.0
        %847 = vmatpush1.msra.mxu0 0.0
        %848 = vmatprep.subr.mxu0 0.0
        %849 = vmatpush1.msra.mxu0 0.0
        %850 = vmatprep.subr.mxu0 0.0
        %851 = vmatpush1.msra.mxu0 0.0
        %852 = vmatprep.subr.mxu0 0.0
        %853 = vmatpush1.msra.mxu0 0.0
        %854 = vmatprep.subr.mxu0 0.0
        %855 = vmatpush1.msra.mxu0 0.0
        %856 = vmatprep.subr.mxu0 0.0
        %857 = vmatpush1.msra.mxu0 0.0
        %858 = vmatprep.subr.mxu0 0.0
        %859 = vmatpush1.msra.mxu0 0.0
        %860 = vmatprep.mubr.f32.mxu0 0.0
        %861 = vmatmul.mubr.f32.gmra.mrb[0].mxu0 %v785
        %v862 = vpop.f32.mrb[0].mxu0
        %v863 = vadd.f32 %v766, %v862
        %v864 = vpop.f32.mrb[0].mxu0
        %865 = vmatprep.mubr.f32.mxu0 0.0
        %866 = vmatmul.mubr.f32.gmra.mrb[0].mxu0 %v788
        %v867 = vpop.f32.mrb[0].mxu0
        %v868 = vadd.f32 %v771, %v867
        %v869 = vpop.f32.mrb[0].mxu0
        %870 = vmatprep.mubr.f32.mxu0 0.0
        %871 = vmatmul.mubr.f32.gmra.mrb[0].mxu0 %v791
        %v872 = vpop.f32.mrb[0].mxu0
        %v873 = vadd.f32 %v776, %v872
        %v874 = vpop.f32.mrb[0].mxu0
        %875 = vmatprep.mubr.f32.mxu0 0.0
        %876 = vmatmul.mubr.f32.gmra.mrb[0].mxu0 %v794
        %v877 = vpop.f32.mrb[0].mxu0
        %v878 = vadd.f32 %v781, %v877
        %v879 = vpop.f32.mrb[0].mxu0
        %880 = vdwg.mxu0
        %v881 = vld [vmem:[%s7] sm:$0xff]
        %v882 = vld [vmem:[%s7 + $0x8] sm:$0xff]
        %v883 = vld [vmem:[%s7 + $0x10] sm:$0xff]
        %v884 = vld [vmem:[%s7 + $0x18] sm:$0xff]
        %v885 = vld [vmem:[%s8] sm:$0xff]
        %v886 = vld [vmem:[%s8 + $0x8] sm:$0xff]
        %v887 = vld [vmem:[%s8 + $0x10] sm:$0xff]
        %v888 = vld [vmem:[%s8 + $0x18] sm:$0xff]
        %v889 = vadd.f32 %v863, %v868
        %v890 = vadd.f32 %v889, %v873
        %v891 = vadd.f32 %v890, %v878
        %v892 = vrot.slane %v891, 4
        %v893 = vadd.f32 %v891, %v892
        %v894 = vrot.slane %v893, 2
        %v895 = vadd.f32 %v893, %v894
        %v896 = vrot.slane %v895, 1
        %v897 = vadd.f32 %v895, %v896
        %v898 = vmul.f32 %v897, %v677
        %v899 = vsub.f32 %v863, %v898
        %v900 = vsub.f32 %v868, %v898
        %v901 = vsub.f32 %v873, %v898
        %v902 = vsub.f32 %v878, %v898
        %v903 = vmul.f32 %v899, %v899
        %v904 = vmul.f32 %v900, %v900
        %v905 = vmul.f32 %v901, %v901
        %v906 = vmul.f32 %v902, %v902
        %v907 = vadd.f32 %v903, %v904
        %v908 = vadd.f32 %v907, %v905
        %v909 = vadd.f32 %v908, %v906
        %v910 = vrot.slane %v909, 4
        %v911 = vadd.f32 %v909, %v910
        %v912 = vrot.slane %v911, 2
        %v913 = vadd.f32 %v911, %v912
        %v914 = vrot.slane %v913, 1
        %v915 = vadd.f32 %v913, %v914
        %v916 = vmul.f32 %v915, %v677
        %v917 = vadd.f32 %v916, 1e-05
        %v918 = vrsqrt.pop %v917
        %v919 = vmul.f32 %v899, %v918
        %v920 = vmul.f32 %v900, %v918
        %v921 = vmul.f32 %v901, %v918
        %v922 = vmul.f32 %v902, %v918
        %924 = vset.pattern.permute.xlu0 0
        %925 = vperm.xlu0 %924, %v881
        %v926 = vpop.permute.xlu0 %925
        %929 = vset.pattern.permute.xlu0 0
        %930 = vperm.xlu0 %929, %v882
        %v931 = vpop.permute.xlu0 %930
        %934 = vset.pattern.permute.xlu0 0
        %935 = vperm.xlu0 %934, %v883
        %v936 = vpop.permute.xlu0 %935
        %939 = vset.pattern.permute.xlu0 0
        %940 = vperm.xlu0 %939, %v884
        %v941 = vpop.permute.xlu0 %940
        %v943 = vmul.f32 %v919, %v926
        %v944 = vmul.f32 %v920, %v931
        %v945 = vmul.f32 %v921, %v936
        %v946 = vmul.f32 %v922, %v941
        %948 = vset.pattern.permute.xlu0 0
        %949 = vperm.xlu0 %948, %v885
        %v950 = vpop.permute.xlu0 %949
        %953 = vset.pattern.permute.xlu0 0
        %954 = vperm.xlu0 %953, %v886
        %v955 = vpop.permute.xlu0 %954
        %958 = vset.pattern.permute.xlu0 0
        %959 = vperm.xlu0 %958, %v887
        %v960 = vpop.permute.xlu0 %959
        %963 = vset.pattern.permute.xlu0 0
        %964 = vperm.xlu0 %963, %v888
        %v965 = vpop.permute.xlu0 %964
        %v967 = vadd.f32 %v943, %v950
        %v968 = vadd.f32 %v944, %v955
        %v969 = vadd.f32 %v945, %v960
        %v970 = vadd.f32 %v946, %v965
        %v971 = vmin.f32 %v967, 40.0
        %v972 = vmin.f32 %v968, 40.0
        %v973 = vmin.f32 %v969, 40.0
        %v974 = vmin.f32 %v970, 40.0
        %v975 = vmul.f32 %v971, 1.442695
        %v976 = vpow.pop %v975
        %v977 = vmul.f32 %v972, 1.442695
        %v978 = vpow.pop %v977
        %v979 = vmul.f32 %v973, 1.442695
        %v980 = vpow.pop %v979
        %v981 = vmul.f32 %v974, 1.442695
        %v982 = vpow.pop %v981
        %v983 = vadd.f32 %v976, 2.0
        %v984 = vadd.f32 %v978, 2.0
        %v985 = vadd.f32 %v980, 2.0
        %v986 = vadd.f32 %v982, 2.0
        %v987 = vmul.f32 %v976, %v983
        %v988 = vmul.f32 %v978, %v984
        %v989 = vmul.f32 %v980, %v985
        %v990 = vmul.f32 %v982, %v986
        %v991 = vadd.f32 %v987, 2.0
        %v992 = vadd.f32 %v988, 2.0
        %v993 = vadd.f32 %v989, 2.0
        %v994 = vadd.f32 %v990, 2.0
        %v995 = vrcp.pop %v991
        %v996 = vrcp.pop %v992
        %v997 = vrcp.pop %v993
        %v998 = vrcp.pop %v994
        %v999 = vmul.f32 %v991, %v995
        %v1000 = vmul.f32 %v992, %v996
        %v1001 = vmul.f32 %v993, %v997
        %v1002 = vmul.f32 %v994, %v998
        %v1003 = vsub.f32 2.0, %v999
        %v1004 = vsub.f32 2.0, %v1000
        %v1005 = vsub.f32 2.0, %v1001
        %v1006 = vsub.f32 2.0, %v1002
        %v1007 = vmul.f32 %v995, %v1003
        %v1008 = vmul.f32 %v996, %v1004
        %v1009 = vmul.f32 %v997, %v1005
        %v1010 = vmul.f32 %v998, %v1006
        %v1011 = vmul.f32 %v987, %v1007
        %v1012 = vmul.f32 %v988, %v1008
        %v1013 = vmul.f32 %v989, %v1009
        %v1014 = vmul.f32 %v990, %v1010
        %v1015 = vmul.f32 %v967, %v1011
        %v1016 = vmul.f32 %v968, %v1012
        %v1017 = vmul.f32 %v969, %v1013
        %v1018 = vmul.f32 %v970, %v1014
        %v1019 = vld [vmem:[%s9] sm:$0xff]
        %v1020 = vld [vmem:[%s9 + $0x8] sm:$0xff]
        %v1021 = vld [vmem:[%s9 + $0x10] sm:$0xff]
        %v1022 = vld [vmem:[%s9 + $0x18] sm:$0xff]
        %v1023 = vld [vmem:[%s10] sm:$0xff]
        %v1024 = vld [vmem:[%s10 + $0x8] sm:$0xff]
        %v1025 = vld [vmem:[%s10 + $0x10] sm:$0xff]
        %v1026 = vld [vmem:[%s10 + $0x18] sm:$0xff]
        %1028 = vset.pattern.permute.xlu0 0
        %1029 = vperm.xlu0 %1028, %v1023
        %v1030 = vpop.permute.xlu0 %1029
        %1033 = vset.pattern.permute.xlu0 0
        %1034 = vperm.xlu0 %1033, %v1024
        %v1035 = vpop.permute.xlu0 %1034
        %1038 = vset.pattern.permute.xlu0 0
        %1039 = vperm.xlu0 %1038, %v1025
        %v1040 = vpop.permute.xlu0 %1039
        %1043 = vset.pattern.permute.xlu0 0
        %1044 = vperm.xlu0 %1043, %v1026
        %v1045 = vpop.permute.xlu0 %1044
        %v1048 = vsel %vm783, %v1019, 0
        %v1051 = vsel %vm783, %v1020, 0
        %v1054 = vsel %vm783, %v1021, 0
        %v1057 = vsel %vm783, %v1022, 0
        %1059 = vmatprep.subr.mxu0 0.0
        %1060 = vmatpush1.msra.mxu0 %v1015
        %1061 = vmatprep.subr.mxu0 0.0
        %1062 = vmatpush1.msra.mxu0 %v1016
        %1063 = vmatprep.subr.mxu0 0.0
        %1064 = vmatpush1.msra.mxu0 %v1017
        %1065 = vmatprep.subr.mxu0 0.0
        %1066 = vmatpush1.msra.mxu0 %v1018
        %1067 = vmatprep.subr.mxu0 0.0
        %1068 = vmatpush1.msra.mxu0 0.0
        %1069 = vmatprep.subr.mxu0 0.0
        %1070 = vmatpush1.msra.mxu0 0.0
        %1071 = vmatprep.subr.mxu0 0.0
        %1072 = vmatpush1.msra.mxu0 0.0
        %1073 = vmatprep.subr.mxu0 0.0
        %1074 = vmatpush1.msra.mxu0 0.0
        %1075 = vmatprep.subr.mxu0 0.0
        %1076 = vmatpush1.msra.mxu0 0.0
        %1077 = vmatprep.subr.mxu0 0.0
        %1078 = vmatpush1.msra.mxu0 0.0
        %1079 = vmatprep.subr.mxu0 0.0
        %1080 = vmatpush1.msra.mxu0 0.0
        %1081 = vmatprep.subr.mxu0 0.0
        %1082 = vmatpush1.msra.mxu0 0.0
        %1083 = vmatprep.subr.mxu0 0.0
        %1084 = vmatpush1.msra.mxu0 0.0
        %1085 = vmatprep.subr.mxu0 0.0
        %1086 = vmatpush1.msra.mxu0 0.0
        %1087 = vmatprep.subr.mxu0 0.0
        %1088 = vmatpush1.msra.mxu0 0.0
        %1089 = vmatprep.subr.mxu0 0.0
        %1090 = vmatpush1.msra.mxu0 0.0
        %1091 = vmatprep.subr.mxu0 0.0
        %1092 = vmatpush1.msra.mxu0 0.0
        %1093 = vmatprep.subr.mxu0 0.0
        %1094 = vmatpush1.msra.mxu0 0.0
        %1095 = vmatprep.subr.mxu0 0.0
        %1096 = vmatpush1.msra.mxu0 0.0
        %1097 = vmatprep.subr.mxu0 0.0
        %1098 = vmatpush1.msra.mxu0 0.0
        %1099 = vmatprep.subr.mxu0 0.0
        %1100 = vmatpush1.msra.mxu0 0.0
        %1101 = vmatprep.subr.mxu0 0.0
        %1102 = vmatpush1.msra.mxu0 0.0
        %1103 = vmatprep.subr.mxu0 0.0
        %1104 = vmatpush1.msra.mxu0 0.0
        %1105 = vmatprep.subr.mxu0 0.0
        %1106 = vmatpush1.msra.mxu0 0.0
        %1107 = vmatprep.subr.mxu0 0.0
        %1108 = vmatpush1.msra.mxu0 0.0
        %1109 = vmatprep.subr.mxu0 0.0
        %1110 = vmatpush1.msra.mxu0 0.0
        %1111 = vmatprep.subr.mxu0 0.0
        %1112 = vmatpush1.msra.mxu0 0.0
        %1113 = vmatprep.subr.mxu0 0.0
        %1114 = vmatpush1.msra.mxu0 0.0
        %1115 = vmatprep.subr.mxu0 0.0
        %1116 = vmatpush1.msra.mxu0 0.0
        %1117 = vmatprep.subr.mxu0 0.0
        %1118 = vmatpush1.msra.mxu0 0.0
        %1119 = vmatprep.subr.mxu0 0.0
        %1120 = vmatpush1.msra.mxu0 0.0
        %1121 = vmatprep.subr.mxu0 0.0
        %1122 = vmatpush1.msra.mxu0 0.0
        %1123 = vmatprep.mubr.f32.mxu0 0.0
        %1124 = vmatmul.mubr.f32.gmra.mrb[0].mxu0 %v1048
        %v1125 = vpop.f32.mrb[0].mxu0
        %v1126 = vadd.f32 %v1030, %v1125
        %v1127 = vpop.f32.mrb[0].mxu0
        %1128 = vmatprep.mubr.f32.mxu0 0.0
        %1129 = vmatmul.mubr.f32.gmra.mrb[0].mxu0 %v1051
        %v1130 = vpop.f32.mrb[0].mxu0
        %v1131 = vadd.f32 %v1035, %v1130
        %v1132 = vpop.f32.mrb[0].mxu0
        %1133 = vmatprep.mubr.f32.mxu0 0.0
        %1134 = vmatmul.mubr.f32.gmra.mrb[0].mxu0 %v1054
        %v1135 = vpop.f32.mrb[0].mxu0
        %v1136 = vadd.f32 %v1040, %v1135
        %v1137 = vpop.f32.mrb[0].mxu0
        %1138 = vmatprep.mubr.f32.mxu0 0.0
        %1139 = vmatmul.mubr.f32.gmra.mrb[0].mxu0 %v1057
        %v1140 = vpop.f32.mrb[0].mxu0
        %v1141 = vadd.f32 %v1045, %v1140
        %v1142 = vpop.f32.mrb[0].mxu0
        %1143 = vdwg.mxu0
        %v1144 = vld [vmem:[%s11] sm:$0xff]
        %v1145 = vld [vmem:[%s11 + $0x8] sm:$0xff]
        %v1146 = vld [vmem:[%s11 + $0x10] sm:$0xff]
        %v1147 = vld [vmem:[%s11 + $0x18] sm:$0xff]
        %v1148 = vld [vmem:[%s12] sm:$0xff]
        %v1149 = vld [vmem:[%s12 + $0x8] sm:$0xff]
        %v1150 = vld [vmem:[%s12 + $0x10] sm:$0xff]
        %v1151 = vld [vmem:[%s12 + $0x18] sm:$0xff]
        %v1152 = vadd.f32 %v1126, %v1131
        %v1153 = vadd.f32 %v1152, %v1136
        %v1154 = vadd.f32 %v1153, %v1141
        %v1155 = vrot.slane %v1154, 4
        %v1156 = vadd.f32 %v1154, %v1155
        %v1157 = vrot.slane %v1156, 2
        %v1158 = vadd.f32 %v1156, %v1157
        %v1159 = vrot.slane %v1158, 1
        %v1160 = vadd.f32 %v1158, %v1159
        %v1161 = vmul.f32 %v1160, %v677
        %v1162 = vsub.f32 %v1126, %v1161
        %v1163 = vsub.f32 %v1131, %v1161
        %v1164 = vsub.f32 %v1136, %v1161
        %v1165 = vsub.f32 %v1141, %v1161
        %v1166 = vmul.f32 %v1162, %v1162
        %v1167 = vmul.f32 %v1163, %v1163
        %v1168 = vmul.f32 %v1164, %v1164
        %v1169 = vmul.f32 %v1165, %v1165
        %v1170 = vadd.f32 %v1166, %v1167
        %v1171 = vadd.f32 %v1170, %v1168
        %v1172 = vadd.f32 %v1171, %v1169
        %v1173 = vrot.slane %v1172, 4
        %v1174 = vadd.f32 %v1172, %v1173
        %v1175 = vrot.slane %v1174, 2
        %v1176 = vadd.f32 %v1174, %v1175
        %v1177 = vrot.slane %v1176, 1
        %v1178 = vadd.f32 %v1176, %v1177
        %v1179 = vmul.f32 %v1178, %v677
        %v1180 = vadd.f32 %v1179, 1e-05
        %v1181 = vrsqrt.pop %v1180
        %v1182 = vmul.f32 %v1162, %v1181
        %v1183 = vmul.f32 %v1163, %v1181
        %v1184 = vmul.f32 %v1164, %v1181
        %v1185 = vmul.f32 %v1165, %v1181
        %1187 = vset.pattern.permute.xlu0 0
        %1188 = vperm.xlu0 %1187, %v1144
        %v1189 = vpop.permute.xlu0 %1188
        %1192 = vset.pattern.permute.xlu0 0
        %1193 = vperm.xlu0 %1192, %v1145
        %v1194 = vpop.permute.xlu0 %1193
        %1197 = vset.pattern.permute.xlu0 0
        %1198 = vperm.xlu0 %1197, %v1146
        %v1199 = vpop.permute.xlu0 %1198
        %1202 = vset.pattern.permute.xlu0 0
        %1203 = vperm.xlu0 %1202, %v1147
        %v1204 = vpop.permute.xlu0 %1203
        %v1206 = vmul.f32 %v1182, %v1189
        %v1207 = vmul.f32 %v1183, %v1194
        %v1208 = vmul.f32 %v1184, %v1199
        %v1209 = vmul.f32 %v1185, %v1204
        %1211 = vset.pattern.permute.xlu0 0
        %1212 = vperm.xlu0 %1211, %v1148
        %v1213 = vpop.permute.xlu0 %1212
        %1216 = vset.pattern.permute.xlu0 0
        %1217 = vperm.xlu0 %1216, %v1149
        %v1218 = vpop.permute.xlu0 %1217
        %1221 = vset.pattern.permute.xlu0 0
        %1222 = vperm.xlu0 %1221, %v1150
        %v1223 = vpop.permute.xlu0 %1222
        %1226 = vset.pattern.permute.xlu0 0
        %1227 = vperm.xlu0 %1226, %v1151
        %v1228 = vpop.permute.xlu0 %1227
        %v1230 = vadd.f32 %v1206, %v1213
        %v1231 = vadd.f32 %v1207, %v1218
        %v1232 = vadd.f32 %v1208, %v1223
        %v1233 = vadd.f32 %v1209, %v1228
        %v1234 = vmin.f32 %v1230, 40.0
        %v1235 = vmin.f32 %v1231, 40.0
        %v1236 = vmin.f32 %v1232, 40.0
        %v1237 = vmin.f32 %v1233, 40.0
        %v1238 = vmul.f32 %v1234, 1.442695
        %v1239 = vpow.pop %v1238
        %v1240 = vmul.f32 %v1235, 1.442695
        %v1241 = vpow.pop %v1240
        %v1242 = vmul.f32 %v1236, 1.442695
        %v1243 = vpow.pop %v1242
        %v1244 = vmul.f32 %v1237, 1.442695
        %v1245 = vpow.pop %v1244
        %v1246 = vadd.f32 %v1239, 2.0
        %v1247 = vadd.f32 %v1241, 2.0
        %v1248 = vadd.f32 %v1243, 2.0
        %v1249 = vadd.f32 %v1245, 2.0
        %v1250 = vmul.f32 %v1239, %v1246
        %v1251 = vmul.f32 %v1241, %v1247
        %v1252 = vmul.f32 %v1243, %v1248
        %v1253 = vmul.f32 %v1245, %v1249
        %v1254 = vadd.f32 %v1250, 2.0
        %v1255 = vadd.f32 %v1251, 2.0
        %v1256 = vadd.f32 %v1252, 2.0
        %v1257 = vadd.f32 %v1253, 2.0
        %v1258 = vrcp.pop %v1254
        %v1259 = vrcp.pop %v1255
        %v1260 = vrcp.pop %v1256
        %v1261 = vrcp.pop %v1257
        %v1262 = vmul.f32 %v1254, %v1258
        %v1263 = vmul.f32 %v1255, %v1259
        %v1264 = vmul.f32 %v1256, %v1260
        %v1265 = vmul.f32 %v1257, %v1261
        %v1266 = vsub.f32 2.0, %v1262
        %v1267 = vsub.f32 2.0, %v1263
        %v1268 = vsub.f32 2.0, %v1264
        %v1269 = vsub.f32 2.0, %v1265
        %v1270 = vmul.f32 %v1258, %v1266
        %v1271 = vmul.f32 %v1259, %v1267
        %v1272 = vmul.f32 %v1260, %v1268
        %v1273 = vmul.f32 %v1261, %v1269
        %v1274 = vmul.f32 %v1250, %v1270
        %v1275 = vmul.f32 %v1251, %v1271
        %v1276 = vmul.f32 %v1252, %v1272
        %v1277 = vmul.f32 %v1253, %v1273
        %v1278 = vmul.f32 %v1230, %v1274
        %v1279 = vmul.f32 %v1231, %v1275
        %v1280 = vmul.f32 %v1232, %v1276
        %v1281 = vmul.f32 %v1233, %v1277
        %v1282 = vld [vmem:[%s13] sm:$0xff]
        %v1283 = vld [vmem:[%s13 + $0x8] sm:$0xff]
        %v1284 = vld [vmem:[%s13 + $0x10] sm:$0xff]
        %v1285 = vld [vmem:[%s13 + $0x18] sm:$0xff]
        %1287 = vset.pattern.permute.xlu0 0
        %1288 = vperm.xlu0 %1287, %v1282
        %v1289 = vpop.permute.xlu0 %1288
        %1292 = vset.pattern.permute.xlu0 0
        %1293 = vperm.xlu0 %1292, %v1283
        %v1294 = vpop.permute.xlu0 %1293
        %1297 = vset.pattern.permute.xlu0 0
        %1298 = vperm.xlu0 %1297, %v1284
        %v1299 = vpop.permute.xlu0 %1298
        %1302 = vset.pattern.permute.xlu0 0
        %1303 = vperm.xlu0 %1302, %v1285
        %v1304 = vpop.permute.xlu0 %1303
        %v1306 = vmul.f32 %v1278, %v1289
        %v1307 = vmul.f32 %v1279, %v1294
        %v1308 = vmul.f32 %v1280, %v1299
        %v1309 = vmul.f32 %v1281, %v1304
        %v1310 = vadd.f32 %v1306, %v1307
        %v1311 = vadd.f32 %v1310, %v1308
        %v1312 = vadd.f32 %v1311, %v1309
        %v1313 = vrot.slane %v1312, 4
        %v1314 = vadd.f32 %v1312, %v1313
        %v1315 = vrot.slane %v1314, 2
        %v1316 = vadd.f32 %v1314, %v1315
        %v1317 = vrot.slane %v1316, 1
        %v1318 = vadd.f32 %v1316, %v1317
        %v1319 = vld [vmem:[#allocation2] sm:$0x1]
        %1321 = vset.pattern.permute.xlu0 0
        %1322 = vperm.xlu0 %1321, %v1319
        %v1323 = vpop.permute.xlu0 %1322
        %v1325 = vlaneseq
        %v1326 = vshrl.u32 %v1325, 7
        %v1327 = vsub.s32 0, %v1326
        %v1328 = vrot.slane %v1323, %v1327
        %v1329 = vadd.f32 %v1318, %v1328
        %1330 = vst [vmem:[%s531] sm:$0x1] %v1329
        %s1331 = sand.u32 %s359, 1
        %s1332 = scalar_lea.sflag [#allocation5], %s1331
        %s1333 = sand.u32 %s359, 1
        %s1334 = scalar_lea.vmem [#allocation4], %s1333
        // Predicated region
        $region119: #{tpu_custom_call.1} parent=113 // pred_check
          %p1335 = pneg %p369
        $region120: #{tpu_custom_call.1} parent=113 // pred_check_branch
          %1337 = sbr.rel (%p1335) target = $region122
        $region121: #{tpu_custom_call.1} parent=113 // pred_region
          %s1339 = ssub.s32 16, 16
          %1340 = vsyncadd %s1332, %s1339
          %s1341 = smul.addr %s31, 16
          %s1342 = scalar_lea.hbm %s15, %s1341
          %s1344 = sshll.u32 %s1334, 4
          %s1345 = int_to_ptr.vmem [resolvable:$true] %s1344
          %1347 = dma.vmem_to_hbm [thread:$0]  %s1345, 16, %s1342, %s1332
        $region122: #{tpu_custom_call.1} parent=113 // pred_fallthru
          _
      $region114: #{tpu_custom_call.1} parent=5 // pred_fallthru
        _
      %p1348 = scmp.le.s32.totalorder 2, %s26
      // Predicated region
      $region123: #{tpu_custom_call.1} parent=5 // pred_check
        %p1349 = pneg %p1348
      $region124: #{tpu_custom_call.1} parent=5 // pred_check_branch
        %1351 = sbr.rel (%p1349) target = $region126
      $region125: #{tpu_custom_call.1} parent=5 // pred_region
        %s1352 = ssub.s32 %s26, 2
        // Predicated region
        $region127: #{tpu_custom_call.1} parent=125 // pred_check
          %p1353 = pneg %p375
        $region128: #{tpu_custom_call.1} parent=125 // pred_check_branch
          %1355 = sbr.rel (%p1353) target = $region130
        $region129: #{tpu_custom_call.1} parent=125 // pred_region
          %s1356 = sand.u32 %s360, 1
          %s1357 = scalar_lea.sflag [#allocation5], %s1356
          %s1358 = sand.u32 %s360, 1
          %s1359 = scalar_lea.vmem [#allocation4], %s1358
          %1360 = dma.done %s1357, 16
        $region130: #{tpu_custom_call.1} parent=125 // pred_fallthru
          _
      $region126: #{tpu_custom_call.1} parent=5 // pred_fallthru
        _
    $region6: #{tpu_custom_call.1} parent=1 // loop_footer
      %s30 = sadd.s32 1, %s26
    $region7: #{tpu_custom_call.1} parent=1 // loop_footer_branch
      %25 = sbr.rel target = $region3
    $region8: #{tpu_custom_call.1} parent=1 // loop_exit
      _
    %1361 = vsyncpa [#allocation5], 1
    %s1362 = scalar_lea.sflag [#allocation5], 1
    %1363 = vsyncpa %s1362, 1

</llo_original>
